<compile_context>
chip_gen: v6e
topology: v6e:2x2x1
jax: 0.10.0
libtpu: 0.0.40
codegen_flags: <defaults>
</compile_context>

<pallas_src>
import jax
import jax.numpy as jnp
from jax.experimental import pallas as pl
from jax.experimental.pallas import tpu as pltpu


def cell_kernel(src_ref, hr_ref, c_ref, w_ref, out_ref):
    """Whole Cell forward for one row-tile.

    src_ref, hr_ref : (TILE, D)   node embeddings / relation embeddings
    c_ref : (8, D)   folded per-feature constants:
                     row0=scale0, row1=shift0   (BN of node-1 'pre_add')
                     row2=scale2, row3=shift2   (BN of node-3 'pre_add')
                     row4=h2b  = relu(shift1)   (hoisted node-2 'pre_sub' branch)
                     row5=bias = b*scale3+shift3 (Linear bias w/ final BN folded)
                     rows 6,7 = padding
    w_ref : (3, D, D)  Linear weight (in x out), final BN scale folded in;
                       slices correspond to concat inputs [z, s2, s3].
    out_ref : (TILE, D)
    """
    src = src_ref[...]
    hr = hr_ref[...]
    c = c_ref[...]
    sc0, sh0 = c[0:1, :], c[1:2, :]
    sc2, sh2 = c[2:3, :], c[3:4, :]
    h2b = c[4:5, :]
    bias = c[5:6, :]

    # node 1: OpModule('pre_add')(src_emb, hr) -> BN -> ReLU   => zero_out
    z = jnp.maximum((src + hr) * sc0 + sh0, 0.0)

    # node 2:
    #   'pre_mult' on states[0]=src_emb with zero_out        (no BN/ReLU)
    #   'pre_sub'  on states[1]=zero_out with zero_out -> BN -> ReLU
    #   (z - z) == 0 exactly, so that branch is the constant relu(shift1) = h2b.
    s2 = src * z + h2b

    # node 3:
    #   'pre_add'  on states[1]=zero_out with zero_out -> BN -> ReLU
    #   'pre_mult' on states[2]=s2 with zero_out              (no BN/ReLU)
    s3 = jnp.maximum((z + z) * sc2 + sh2, 0.0) + s2 * z

    # concat([z, s2, s3]) @ W  ==  z@W0 + s2@W1 + s3@W2   (no concat relayout)
    h = jnp.dot(z, w_ref[0], preferred_element_type=jnp.float32)
    h = h + jnp.dot(s2, w_ref[1], preferred_element_type=jnp.float32)
    h = h + jnp.dot(s3, w_ref[2], preferred_element_type=jnp.float32)

    # final BatchNorm1d already folded into w/bias; just bias + ReLU.
    out_ref[...] = jnp.maximum(h + bias, 0.0)


def fold_bn(gamma, beta, mean, var, eps=1e-5):
    scale = gamma / jnp.sqrt(var + eps)
    shift = beta - mean * scale
    return scale, shift


def cell_forward(src_emb, hr, bn_params, w, b, tile=256):
    """bn_params: list of 4 (gamma, beta, mean, var) tuples, each (D,).
    w: (3*D, D) Linear weight already transposed to (in, out); b: (D,)."""
    N, D = src_emb.shape
    assert N % tile == 0, "N must be a multiple of the row tile"
    assert tile % 8 == 0, "row tile must be a multiple of 8 sublanes (f32)"
    # D equals the full array last-dim in every BlockSpec, so the (8,128) rule
    # is satisfied; D % 128 == 0 additionally gives lane-dense (unmasked) stores.

    s0, sh0 = fold_bn(*bn_params[0])
    s1, sh1 = fold_bn(*bn_params[1])
    s2c, sh2 = fold_bn(*bn_params[2])
    s3c, sh3 = fold_bn(*bn_params[3])

    # node-2 'pre_sub' branch is data-independent: relu((z-z)*s1 + sh1) = relu(sh1)
    h2b = jnp.maximum(sh1, 0.0)
    del s1

    # Fold the final BatchNorm into the Linear.
    w_f = (w * s3c[None, :]).astype(jnp.float32)      # (3D, D)
    b_f = b * s3c + sh3                                # (D,)
    w3 = w_f.reshape(3, D, D)                          # slices for [z, s2, s3]

    consts = jnp.zeros((8, D), dtype=jnp.float32)
    consts = (consts.at[0].set(s0).at[1].set(sh0)
                    .at[2].set(s2c).at[3].set(sh2)
                    .at[4].set(h2b).at[5].set(b_f))

    grid = (N // tile,)
    return pl.pallas_call(
        cell_kernel,
        out_shape=jax.ShapeDtypeStruct((N, D), jnp.float32),
        grid_spec=pl.GridSpec(
            grid=grid,
            in_specs=[
                pl.BlockSpec((tile, D), lambda i: (i, 0)),    # src_emb
                pl.BlockSpec((tile, D), lambda i: (i, 0)),    # hr
                pl.BlockSpec((8, D), lambda i: (0, 0)),       # folded constants
                pl.BlockSpec((3, D, D), lambda i: (0, 0, 0)),  # Linear weight
            ],
            out_specs=pl.BlockSpec((tile, D), lambda i: (i, 0)),
        ),
        compiler_params=pltpu.CompilerParams(
            dimension_semantics=("parallel",)),
    )(src_emb, hr, consts, w3)


def reference_forward(src_emb, hr, bn_params, w, b):
    """Plain-JAX reference with the original (unfolded) semantics."""
    def bn_relu(x, idx):
        s_, sh_ = fold_bn(*bn_params[idx])
        return jnp.maximum(x * s_[None, :] + sh_[None, :], 0.0)

    z = bn_relu(src_emb + hr, 0)
    s2 = src_emb * z + bn_relu(z - z, 1)
    s3 = bn_relu(z + z, 2) + s2 * z
    cat = jnp.concatenate([z, s2, s3], axis=1)
    h = cat @ w + b[None, :]
    return bn_relu(h, 3)


if __name__ == "__main__":
    N = 512          # number of graph nodes (batch for BatchNorm1d); 2 grid steps
    D = 128          # args.feature_dim (multiple of 128 -> lane-dense)
    TILE = 256       # row tile (multiple of 8 sublanes)

    key = jax.random.PRNGKey(0)
    keys = jax.random.split(key, 12)

    src_emb = jax.random.normal(keys[0], (N, D), dtype=jnp.float32)
    hr = jax.random.normal(keys[1], (N, D), dtype=jnp.float32)

    # 4 BatchNorm1d parameter sets (3 OpModule BNs used in forward + final Cell BN)
    bn_params = []
    for i in range(4):
        gamma = 1.0 + 0.1 * jax.random.normal(keys[2 + i], (D,), dtype=jnp.float32)
        beta = 0.05 * jax.random.normal(keys[6 + i], (D,), dtype=jnp.float32)
        mean = 0.1 * jnp.arange(D, dtype=jnp.float32) / D
        var = 1.0 + 0.01 * jnp.arange(D, dtype=jnp.float32)
        bn_params.append((gamma, beta, mean, var))

    # concat Linear: in_features = len(concat_node)*D = 3*D, out_features = D
    w = jax.random.normal(keys[10], (3 * D, D), dtype=jnp.float32) / jnp.sqrt(3.0 * D)
    b = 0.01 * jax.random.normal(keys[11], (D,), dtype=jnp.float32)

    out = cell_forward(src_emb, hr, bn_params, w, b, tile=TILE)
    out = jax.block_until_ready(out)

    ref = reference_forward(src_emb, hr, bn_params, w, b)
    assert out.shape == (N, D)
    assert jnp.allclose(out, ref, atol=1e-3, rtol=1e-3), float(jnp.max(jnp.abs(out - ref)))

    print("KERNEL_OK")
</pallas_src>

<mosaic_0001>
module attributes {stable_mosaic.version = 11 : i64} {
  func.func @cell_kernel(%arg0: i32, %arg1: memref<256x128xf32, #tpu.memory_space<vmem>>, %arg2: memref<256x128xf32, #tpu.memory_space<vmem>>, %arg3: memref<8x128xf32, #tpu.memory_space<vmem>>, %arg4: memref<3x128x128xf32, #tpu.memory_space<vmem>>, %arg5: memref<256x128xf32, #tpu.memory_space<vmem>>) attributes {dimension_semantics = [#tpu.dimension_semantics<parallel>], iteration_bounds = array<i64: 2>, scalar_prefetch = 0 : i64, scratch_operands = 0 : i64, tpu.core_type = #tpu.core_type<tc>, window_params = [{transform_indices = @transform_0, window_bounds = array<i64: 256, 128>}, {transform_indices = @transform_1, window_bounds = array<i64: 256, 128>}, {pipeline_mode = #tpu.pipeline_mode<synchronous>, transform_indices = @transform_2, window_bounds = array<i64: 8, 128>}, {pipeline_mode = #tpu.pipeline_mode<synchronous>, transform_indices = @transform_3, window_bounds = array<i64: 3, 128, 128>}, {transform_indices = @transform_4, window_bounds = array<i64: 256, 128>}]} {
    %c0 = arith.constant 0 : index
    %c0_0 = arith.constant 0 : index
    %0 = vector.load %arg1[%c0, %c0_0] : memref<256x128xf32, #tpu.memory_space<vmem>>, vector<256x128xf32>
    %c0_1 = arith.constant 0 : index
    %c0_2 = arith.constant 0 : index
    %1 = vector.load %arg2[%c0_1, %c0_2] : memref<256x128xf32, #tpu.memory_space<vmem>>, vector<256x128xf32>
    %c0_3 = arith.constant 0 : index
    %c0_4 = arith.constant 0 : index
    %2 = vector.load %arg3[%c0_3, %c0_4] : memref<8x128xf32, #tpu.memory_space<vmem>>, vector<8x128xf32>
    %3 = vector.extract_strided_slice %2 {offsets = [0, 0], sizes = [1, 128], strides = [1, 1]} : vector<8x128xf32> to vector<1x128xf32>
    %4 = vector.extract_strided_slice %2 {offsets = [1, 0], sizes = [1, 128], strides = [1, 1]} : vector<8x128xf32> to vector<1x128xf32>
    %5 = vector.extract_strided_slice %2 {offsets = [2, 0], sizes = [1, 128], strides = [1, 1]} : vector<8x128xf32> to vector<1x128xf32>
    %6 = vector.extract_strided_slice %2 {offsets = [3, 0], sizes = [1, 128], strides = [1, 1]} : vector<8x128xf32> to vector<1x128xf32>
    %7 = vector.extract_strided_slice %2 {offsets = [4, 0], sizes = [1, 128], strides = [1, 1]} : vector<8x128xf32> to vector<1x128xf32>
    %8 = vector.extract_strided_slice %2 {offsets = [5, 0], sizes = [1, 128], strides = [1, 1]} : vector<8x128xf32> to vector<1x128xf32>
    %9 = arith.addf %0, %1 : vector<256x128xf32>
    %10 = vector.broadcast %3 : vector<1x128xf32> to vector<256x128xf32>
    %11 = arith.mulf %9, %10 : vector<256x128xf32>
    %12 = vector.broadcast %4 : vector<1x128xf32> to vector<256x128xf32>
    %13 = arith.addf %11, %12 : vector<256x128xf32>
    %cst = arith.constant 0.000000e+00 : f32
    %14 = vector.broadcast %cst : f32 to vector<256x128xf32>
    %15 = arith.maximumf %13, %14 : vector<256x128xf32>
    %16 = arith.mulf %0, %15 : vector<256x128xf32>
    %17 = vector.broadcast %7 : vector<1x128xf32> to vector<256x128xf32>
    %18 = arith.addf %16, %17 : vector<256x128xf32>
    %19 = arith.addf %15, %15 : vector<256x128xf32>
    %20 = vector.broadcast %5 : vector<1x128xf32> to vector<256x128xf32>
    %21 = arith.mulf %19, %20 : vector<256x128xf32>
    %22 = vector.broadcast %6 : vector<1x128xf32> to vector<256x128xf32>
    %23 = arith.addf %21, %22 : vector<256x128xf32>
    %cst_5 = arith.constant 0.000000e+00 : f32
    %24 = vector.broadcast %cst_5 : f32 to vector<256x128xf32>
    %25 = arith.maximumf %23, %24 : vector<256x128xf32>
    %26 = arith.mulf %18, %15 : vector<256x128xf32>
    %27 = arith.addf %25, %26 : vector<256x128xf32>
    %c0_6 = arith.constant 0 : index
    %c0_7 = arith.constant 0 : index
    %c0_8 = arith.constant 0 : index
    %28 = vector.load %arg4[%c0_6, %c0_7, %c0_8] : memref<3x128x128xf32, #tpu.memory_space<vmem>>, vector<1x128x128xf32>
    %29 = vector.shape_cast %28 : vector<1x128x128xf32> to vector<128x128xf32>
    %cst_9 = arith.constant dense<0.000000e+00> : vector<256x128xf32>
    %30 = tpu.matmul %15, %29, %cst_9 {dimension_numbers = #tpu.dot_dimension_numbers<[1], [0], [0], [1], [0, 0, 1, 1], [], []>} : vector<256x128xf32>, vector<128x128xf32>, vector<256x128xf32> -> vector<256x128xf32>
    %c1 = arith.constant 1 : index
    %c0_10 = arith.constant 0 : index
    %c0_11 = arith.constant 0 : index
    %31 = vector.load %arg4[%c1, %c0_10, %c0_11] : memref<3x128x128xf32, #tpu.memory_space<vmem>>, vector<1x128x128xf32>
    %32 = vector.shape_cast %31 : vector<1x128x128xf32> to vector<128x128xf32>
    %cst_12 = arith.constant dense<0.000000e+00> : vector<256x128xf32>
    %33 = tpu.matmul %18, %32, %cst_12 {dimension_numbers = #tpu.dot_dimension_numbers<[1], [0], [0], [1], [0, 0, 1, 1], [], []>} : vector<256x128xf32>, vector<128x128xf32>, vector<256x128xf32> -> vector<256x128xf32>
    %34 = arith.addf %30, %33 : vector<256x128xf32>
    %c2 = arith.constant 2 : index
    %c0_13 = arith.constant 0 : index
    %c0_14 = arith.constant 0 : index
    %35 = vector.load %arg4[%c2, %c0_13, %c0_14] : memref<3x128x128xf32, #tpu.memory_space<vmem>>, vector<1x128x128xf32>
    %36 = vector.shape_cast %35 : vector<1x128x128xf32> to vector<128x128xf32>
    %cst_15 = arith.constant dense<0.000000e+00> : vector<256x128xf32>
    %37 = tpu.matmul %27, %36, %cst_15 {dimension_numbers = #tpu.dot_dimension_numbers<[1], [0], [0], [1], [0, 0, 1, 1], [], []>} : vector<256x128xf32>, vector<128x128xf32>, vector<256x128xf32> -> vector<256x128xf32>
    %38 = arith.addf %34, %37 : vector<256x128xf32>
    %39 = vector.broadcast %8 : vector<1x128xf32> to vector<256x128xf32>
    %40 = arith.addf %38, %39 : vector<256x128xf32>
    %cst_16 = arith.constant 0.000000e+00 : f32
    %41 = vector.broadcast %cst_16 : f32 to vector<256x128xf32>
    %42 = arith.maximumf %40, %41 : vector<256x128xf32>
    %c0_17 = arith.constant 0 : index
    %c0_18 = arith.constant 0 : index
    %43 = vector.load %arg5[%c0_17, %c0_18] : memref<256x128xf32, #tpu.memory_space<vmem>>, vector<256x128xf32>
    tpu.vector_store %arg5[%c0_17, %c0_18], %42 {strides = array<i32>} : memref<256x128xf32, #tpu.memory_space<vmem>>, vector<256x128xf32>,
    return
  }
  func.func @transform_0(%arg0: i32) -> (i32, i32) {
    %c0_i32 = arith.constant 0 : i32
    %c0_i32_0 = arith.constant 0 : i32
    return %arg0, %c0_i32 : i32, i32
  }
  func.func @transform_1(%arg0: i32) -> (i32, i32) {
    %c0_i32 = arith.constant 0 : i32
    %c0_i32_0 = arith.constant 0 : i32
    return %arg0, %c0_i32 : i32, i32
  }
  func.func @transform_2(%arg0: i32) -> (i32, i32) {
    %c0_i32 = arith.constant 0 : i32
    %c0_i32_0 = arith.constant 0 : i32
    %c0_i32_1 = arith.constant 0 : i32
    return %c0_i32, %c0_i32_0 : i32, i32
  }
  func.func @transform_3(%arg0: i32) -> (i32, i32, i32) {
    %c0_i32 = arith.constant 0 : i32
    %c0_i32_0 = arith.constant 0 : i32
    %c0_i32_1 = arith.constant 0 : i32
    %c0_i32_2 = arith.constant 0 : i32
    return %c0_i32, %c0_i32_0, %c0_i32_1 : i32, i32, i32
  }
  func.func @transform_4(%arg0: i32) -> (i32, i32) {
    %c0_i32 = arith.constant 0 : i32
    %c0_i32_0 = arith.constant 0 : i32
    return %arg0, %c0_i32 : i32, i32
  }
}

</mosaic_0001>

<llo_original>
// kernel: tpu_custom_call.1
$region0: #{tpu_custom_call.1}
  #allocation0 [shape = 'u32[]', space=smem, size = 0x4, offset = 0x4, fixed_abs, tag = 'smem constant byte address 0x4 - core index']
  #allocation1 [shape = 'u32[144,128]{1,0:T(1,128)}', space=vmem, size = 0x12000, scoped, tag = 'internal scratch']
  %s0 = inlined_call_operand.hbm [shape: f32[512,128], index: 0, kind: input, shape index: {}]
  %s1 = inlined_call_operand.hbm [shape: f32[512,128], index: 1, kind: input, shape index: {}]
  %s2 = inlined_call_operand.hbm [shape: f32[8,128], index: 2, kind: input, shape index: {}]
  %s3 = inlined_call_operand.hbm [shape: f32[3,128,128], index: 3, kind: input, shape index: {}]
  %s4 = inlined_call_operand.hbm [shape: f32[512,128], index: 4, kind: output, shape index: {}]
  %s5 = sld [smem:[#allocation0]]
  $region65: #{tpu_custom_call.1} parent=0
    _
  %s7 = ssub.s32 1, %s5
  %s8 = scalar_select 0, %s7, %s5
  $region1: #{tpu_custom_call.1} parent=0
    #allocation2 [shape = 'u8[262144]{0}', space=vmem, size = 0x40000, scoped, tag = 'input window, operand 0']
    #allocation3 [shape = 's32[2]{0}', space=sflag, size = 0x8, scoped, tag = 'scoped memory for tpu_custom_call.1']
    #allocation4 [shape = 's32[2]{0}', space=sflag, size = 0x8, scoped, tag = 'scoped memory for tpu_custom_call.1']
    #allocation5 [shape = 'u8[262144]{0}', space=vmem, size = 0x40000, scoped, tag = 'input window, operand 1']
    #allocation6 [shape = 's32[2]{0}', space=sflag, size = 0x8, scoped, tag = 'scoped memory for tpu_custom_call.1']
    #allocation7 [shape = 'u8[4096]{0}', space=vmem, size = 0x1000, scoped, tag = 'input window, operand 2, single buffered']
    #allocation8 [shape = 'u8[196608]{0}', space=vmem, size = 0x30000, scoped, tag = 'input window, operand 3, single buffered']
    #allocation9 [shape = 's32[1]{0}', space=sflag, size = 0x4, scoped, tag = 'scoped memory for tpu_custom_call.1']
    #allocation10 [shape = 'u8[262144]{0}', space=vmem, size = 0x40000, scoped, tag = 'output window, operand 0']
    %9 = vsyncpa [#allocation3], 0
    %s10 = scalar_lea.sflag [#allocation3], 1
    %11 = vsyncpa %s10, 0
    %12 = vsyncpa [#allocation6], 0
    %s13 = scalar_lea.sflag [#allocation6], 1
    %14 = vsyncpa %s13, 0
    %15 = vsyncpa [#allocation9], 0
    %16 = vsyncpa [#allocation4], 0
    %s17 = scalar_lea.sflag [#allocation4], 1
    %18 = vsyncpa %s17, 0
    loop: start=0, step=1, limit=4
    $region2: #{tpu_custom_call.1} parent=1 // loop_pre_header
      _
    $region3: #{tpu_custom_call.1} parent=1 // loop_header
      %s20 = sphi 0, %s24
      %p21 = scmp.ge.s32.totalorder %s20, 4
      %s30 = sphi 0, %s32
      %s33 = sphi 0, %s30
      %s34 = sphi 0, %s33
      %s50 = sphi 0, %s34
      %s56 = sphi 0, %s58
      %s59 = sphi 0, %s56
      %s60 = sphi 0, %s59
      %s76 = sphi 0, %s60
      %s80 = sphi 0, %s80
      %s82 = sphi 0, %s80
      %s83 = sphi 0, %s82
      %s97 = sphi 0, %s83
      %s101 = sphi 0, %s101
      %s103 = sphi 0, %s101
      %s104 = sphi 0, %s103
      %s118 = sphi 0, %s104
      %s124 = sphi 0, %s126
      %s127 = sphi 0, %s124
      %s128 = sphi 0, %s127
      %s144 = sphi 0, %s128
    $region4: #{tpu_custom_call.1} parent=1 // loop_header_branch
      %23 = sbr.rel (%p21) target = $region8
    $region5: #{tpu_custom_call.1} parent=1 // loop_body
      %s25 = ssub.s32 %s20, 1
      %s26 = ssub.s32 %s20, 2
      %s27 = sadd.s32 %s20, 1
      %s28 = ssub.s32 %s20, %s27
      %p29 = scmp.eq.s32.totalorder %s28, 0
      %s31 = sadd.s32 %s30, 1
      %s32 = scalar_select %p29, %s30, %s31
      %p35 = pneg %p29
      %p36 = scmp.eq.s32.totalorder %s20, 1
      %p37 = por %p35, %p36
      %p38 = scmp.ne.s32.totalorder %s30, %s33
      %p39 = scmp.eq.s32.totalorder %s20, 0
      %p40 = por %p38, %p39
      %p41 = scmp.ne.s32.totalorder %s30, %s33
      %p42 = scmp.eq.s32.totalorder %s25, 1
      %p43 = por %p41, %p42
      %p44 = scmp.ne.s32.totalorder %s33, %s34
      %p45 = scmp.eq.s32.totalorder %s25, 0
      %p46 = por %p44, %p45
      %p47 = scmp.ne.s32.totalorder %s33, %s34
      %p48 = scmp.eq.s32.totalorder %s26, 1
      %p49 = por %p47, %p48
      %p51 = scmp.ne.s32.totalorder %s34, %s50
      %p52 = scmp.eq.s32.totalorder %s26, 0
      %p53 = por %p51, %p52
      %s54 = ssub.s32 %s20, %s27
      %p55 = scmp.eq.s32.totalorder %s54, 0
      %s57 = sadd.s32 %s56, 1
      %s58 = scalar_select %p55, %s56, %s57
      %p61 = pneg %p55
      %p62 = scmp.eq.s32.totalorder %s20, 1
      %p63 = por %p61, %p62
      %p64 = scmp.ne.s32.totalorder %s56, %s59
      %p65 = scmp.eq.s32.totalorder %s20, 0
      %p66 = por %p64, %p65
      %p67 = scmp.ne.s32.totalorder %s56, %s59
      %p68 = scmp.eq.s32.totalorder %s25, 1
      %p69 = por %p67, %p68
      %p70 = scmp.ne.s32.totalorder %s59, %s60
      %p71 = scmp.eq.s32.totalorder %s25, 0
      %p72 = por %p70, %p71
      %p73 = scmp.ne.s32.totalorder %s59, %s60
      %p74 = scmp.eq.s32.totalorder %s26, 1
      %p75 = por %p73, %p74
      %p77 = scmp.ne.s32.totalorder %s60, %s76
      %p78 = scmp.eq.s32.totalorder %s26, 0
      %p79 = por %p77, %p78
      %s81 = sadd.s32 %s80, 1
      %p84 = scmp.eq.s32.totalorder %s20, 1
      %p85 = scmp.ne.s32.totalorder %s80, %s82
      %p86 = scmp.eq.s32.totalorder %s20, 0
      %p87 = por %p85, %p86
      %p88 = scmp.ne.s32.totalorder %s80, %s82
      %p89 = scmp.eq.s32.totalorder %s25, 1
      %p90 = por %p88, %p89
      %p91 = scmp.ne.s32.totalorder %s82, %s83
      %p92 = scmp.eq.s32.totalorder %s25, 0
      %p93 = por %p91, %p92
      %p94 = scmp.ne.s32.totalorder %s82, %s83
      %p95 = scmp.eq.s32.totalorder %s26, 1
      %p96 = por %p94, %p95
      %p98 = scmp.ne.s32.totalorder %s83, %s97
      %p99 = scmp.eq.s32.totalorder %s26, 0
      %p100 = por %p98, %p99
      %s102 = sadd.s32 %s101, 1
      %p105 = scmp.eq.s32.totalorder %s20, 1
      %p106 = scmp.ne.s32.totalorder %s101, %s103
      %p107 = scmp.eq.s32.totalorder %s20, 0
      %p108 = por %p106, %p107
      %p109 = scmp.ne.s32.totalorder %s101, %s103
      %p110 = scmp.eq.s32.totalorder %s25, 1
      %p111 = por %p109, %p110
      %p112 = scmp.ne.s32.totalorder %s103, %s104
      %p113 = scmp.eq.s32.totalorder %s25, 0
      %p114 = por %p112, %p113
      %p115 = scmp.ne.s32.totalorder %s103, %s104
      %p116 = scmp.eq.s32.totalorder %s26, 1
      %p117 = por %p115, %p116
      %p119 = scmp.ne.s32.totalorder %s104, %s118
      %p120 = scmp.eq.s32.totalorder %s26, 0
      %p121 = por %p119, %p120
      %s122 = ssub.s32 %s20, %s27
      %p123 = scmp.eq.s32.totalorder %s122, 0
      %s125 = sadd.s32 %s124, 1
      %s126 = scalar_select %p123, %s124, %s125
      %p129 = pneg %p123
      %p130 = scmp.eq.s32.totalorder %s20, 1
      %p131 = por %p129, %p130
      %p132 = scmp.ne.s32.totalorder %s124, %s127
      %p133 = scmp.eq.s32.totalorder %s20, 0
      %p134 = por %p132, %p133
      %p135 = scmp.ne.s32.totalorder %s124, %s127
      %p136 = scmp.eq.s32.totalorder %s25, 1
      %p137 = por %p135, %p136
      %p138 = scmp.ne.s32.totalorder %s127, %s128
      %p139 = scmp.eq.s32.totalorder %s25, 0
      %p140 = por %p138, %p139
      %p141 = scmp.ne.s32.totalorder %s127, %s128
      %p142 = scmp.eq.s32.totalorder %s26, 1
      %p143 = por %p141, %p142
      %p145 = scmp.ne.s32.totalorder %s128, %s144
      %p146 = scmp.eq.s32.totalorder %s26, 0
      %p147 = por %p145, %p146
      %p148 = scmp.le.s32.totalorder 1, %s20
      %p149 = scmp.lt.s32.totalorder %s20, 3
      %p150 = pnand %p148, %p149
      %p151 = pneg %p150
      // Predicated region
      $region9: #{tpu_custom_call.1} parent=5 // pred_check
        _
      $region10: #{tpu_custom_call.1} parent=5 // pred_check_branch
        %153 = sbr.rel (%p150) target = $region12
      $region11: #{tpu_custom_call.1} parent=5 // pred_region
        %s154 = ssub.s32 %s20, 1
        // Predicated region
        $region13: #{tpu_custom_call.1} parent=11 // pred_check
          %p155 = pneg %p93
        $region14: #{tpu_custom_call.1} parent=11 // pred_check_branch
          %157 = sbr.rel (%p155) target = $region16
        $region15: #{tpu_custom_call.1} parent=11 // pred_region
          %s159 = ssub.s32 128, 128
          %160 = vsyncadd [#allocation6], %s159
          %s162 = sshll.u32 [#allocation7], 4
          %s163 = int_to_ptr.vmem [resolvable:$true] %s162
          %165 = dma.hbm_to_vmem [thread:$0]  %s2, 128, %s163, [#allocation6]
        $region16: #{tpu_custom_call.1} parent=11 // pred_fallthru
          _
        // Predicated region
        $region17: #{tpu_custom_call.1} parent=11 // pred_check
          %p166 = pneg %p114
        $region18: #{tpu_custom_call.1} parent=11 // pred_check_branch
          %168 = sbr.rel (%p166) target = $region20
        $region19: #{tpu_custom_call.1} parent=11 // pred_region
          %s170 = ssub.s32 6144, 6144
          %171 = vsyncadd [#allocation9], %s170
          %s172 = sshll.u32 [#allocation8], 4
          %s173 = int_to_ptr.vmem [resolvable:$true] %s172
          %178 = dma.hbm_to_vmem [thread:$0]  %s3, 6144, %s173, [#allocation9], 128, 128, 8
        $region20: #{tpu_custom_call.1} parent=11 // pred_fallthru
          _
      $region12: #{tpu_custom_call.1} parent=5 // pred_fallthru
        _
      %p179 = scmp.lt.s32.totalorder %s20, 2
      // Predicated region
      $region21: #{tpu_custom_call.1} parent=5 // pred_check
        %p180 = pneg %p179
      $region22: #{tpu_custom_call.1} parent=5 // pred_check_branch
        %182 = sbr.rel (%p180) target = $region24
      $region23: #{tpu_custom_call.1} parent=5 // pred_region
        // Predicated region
        $region25: #{tpu_custom_call.1} parent=23 // pred_check
          %p183 = pneg %p40
        $region26: #{tpu_custom_call.1} parent=23 // pred_check_branch
          %185 = sbr.rel (%p183) target = $region28
        $region27: #{tpu_custom_call.1} parent=23 // pred_region
          %s186 = sand.u32 %s30, 1
          %s187 = scalar_lea.sflag [#allocation3], %s186
          %s188 = sand.u32 %s30, 1
          %s189 = smul.addr %s188, 256
          %s190 = scalar_lea.vmem [#allocation2], %s189
          %s191 = smul.u32 32, %s20
          %s193 = ssub.s32 4096, 4096
          %194 = vsyncadd %s187, %s193
          %s195 = smul.addr %s191, 128
          %s196 = scalar_lea.hbm %s0, %s195
          %s197 = sshll.u32 %s190, 4
          %s198 = int_to_ptr.vmem [resolvable:$true] %s197
          %203 = dma.hbm_to_vmem [thread:$0]  %s196, 4096, %s198, %s187, 128, 128, 8
        $region28: #{tpu_custom_call.1} parent=23 // pred_fallthru
          _
        // Predicated region
        $region29: #{tpu_custom_call.1} parent=23 // pred_check
          %p204 = pneg %p66
        $region30: #{tpu_custom_call.1} parent=23 // pred_check_branch
          %206 = sbr.rel (%p204) target = $region32
        $region31: #{tpu_custom_call.1} parent=23 // pred_region
          %s207 = sand.u32 %s20, 1
          %s208 = scalar_lea.sflag [#allocation6], %s207
          %s209 = sand.u32 %s56, 1
          %s210 = smul.addr %s209, 256
          %s211 = scalar_lea.vmem [#allocation5], %s210
          %s212 = smul.u32 32, %s20
          %s214 = ssub.s32 4096, 4096
          %215 = vsyncadd %s208, %s214
          %s216 = smul.addr %s212, 128
          %s217 = scalar_lea.hbm %s1, %s216
          %s218 = sshll.u32 %s211, 4
          %s219 = int_to_ptr.vmem [resolvable:$true] %s218
          %224 = dma.hbm_to_vmem [thread:$0]  %s217, 4096, %s219, %s208, 128, 128, 8
        $region32: #{tpu_custom_call.1} parent=23 // pred_fallthru
          _
      $region24: #{tpu_custom_call.1} parent=5 // pred_fallthru
        _
      %p225 = scmp.le.s32.totalorder 1, %s20
      %p226 = scmp.lt.s32.totalorder %s20, 3
      %p227 = pnand %p225, %p226
      %p228 = pneg %p227
      // Predicated region
      $region33: #{tpu_custom_call.1} parent=5 // pred_check
        _
      $region34: #{tpu_custom_call.1} parent=5 // pred_check_branch
        %230 = sbr.rel (%p227) target = $region36
      $region35: #{tpu_custom_call.1} parent=5 // pred_region
        %s231 = ssub.s32 %s20, 1
        %s232 = sand.u32 %s33, 1
        %s233 = scalar_lea.sflag [#allocation3], %s232
        %s234 = sand.u32 %s33, 1
        %s235 = smul.addr %s234, 256
        %s236 = scalar_lea.vmem [#allocation2], %s235
        // Predicated region
        $region37: #{tpu_custom_call.1} parent=35 // pred_check
          %p237 = pneg %p46
        $region38: #{tpu_custom_call.1} parent=35 // pred_check_branch
          %239 = sbr.rel (%p237) target = $region40
        $region39: #{tpu_custom_call.1} parent=35 // pred_region
          %240 = dma.done %s233, 4096
        $region40: #{tpu_custom_call.1} parent=35 // pred_fallthru
          _
        %s241 = sand.u32 %s25, 1
        %s242 = scalar_lea.sflag [#allocation6], %s241
        %s243 = sand.u32 %s59, 1
        %s244 = smul.addr %s243, 256
        %s245 = scalar_lea.vmem [#allocation5], %s244
        // Predicated region
        $region41: #{tpu_custom_call.1} parent=35 // pred_check
          %p246 = pneg %p72
        $region42: #{tpu_custom_call.1} parent=35 // pred_check_branch
          %248 = sbr.rel (%p246) target = $region44
        $region43: #{tpu_custom_call.1} parent=35 // pred_region
          %249 = dma.done %s242, 4096
        $region44: #{tpu_custom_call.1} parent=35 // pred_fallthru
          _
        // Predicated region
        $region45: #{tpu_custom_call.1} parent=35 // pred_check
          %p250 = pneg %p93
        $region46: #{tpu_custom_call.1} parent=35 // pred_check_branch
          %252 = sbr.rel (%p250) target = $region48
        $region47: #{tpu_custom_call.1} parent=35 // pred_region
          %253 = dma.done [#allocation6], 128
        $region48: #{tpu_custom_call.1} parent=35 // pred_fallthru
          _
        // Predicated region
        $region49: #{tpu_custom_call.1} parent=35 // pred_check
          %p254 = pneg %p114
        $region50: #{tpu_custom_call.1} parent=35 // pred_check_branch
          %256 = sbr.rel (%p254) target = $region52
        $region51: #{tpu_custom_call.1} parent=35 // pred_region
          %257 = dma.done [#allocation9], 6144
        $region52: #{tpu_custom_call.1} parent=35 // pred_fallthru
          _
        %s258 = sand.u32 %s33, 1
        %s259 = scalar_lea.sflag [#allocation3], %s258
        %s260 = sand.u32 %s33, 1
        %s261 = smul.addr %s260, 256
        %s262 = scalar_lea.vmem [#allocation2], %s261
        %p263 = pneg %p46
        %p264 = pneg %p43
        %s265 = sand.u32 %s25, 1
        %s266 = scalar_lea.sflag [#allocation6], %s265
        %s267 = sand.u32 %s59, 1
        %s268 = smul.addr %s267, 256
        %s269 = scalar_lea.vmem [#allocation5], %s268
        %p270 = pneg %p72
        %p271 = pneg %p69
        %p272 = pneg %p93
        %p273 = pneg %p90
        %p274 = pneg %p114
        %p275 = pneg %p111
        %p276 = pneg %p140
        %p277 = pneg %p137
        %s278 = sand.u32 %s127, 1
        %s279 = scalar_lea.sflag [#allocation4], %s278
        %s280 = sand.u32 %s127, 1
        %s281 = smul.addr %s280, 256
        %s282 = scalar_lea.vmem [#allocation10], %s281
        %s283 = smul.u32 32, %s25
        %s284 = smul.u32 32, %s25
        %s285 = smul.u32 32, %s25
        %v286 = vld [vmem:[%s236] sm:$0xff]
        %v287 = vld [vmem:[%s236 + $0x8] sm:$0xff]
        %v288 = vld [vmem:[%s236 + $0x10] sm:$0xff]
        %v289 = vld [vmem:[%s236 + $0x18] sm:$0xff]
        %v290 = vld [vmem:[%s236 + $0x20] sm:$0xff]
        %v291 = vld [vmem:[%s236 + $0x28] sm:$0xff]
        %v292 = vld [vmem:[%s236 + $0x30] sm:$0xff]
        %v293 = vld [vmem:[%s236 + $0x38] sm:$0xff]
        %v294 = vld [vmem:[%s236 + $0x40] sm:$0xff]
        %v295 = vld [vmem:[%s236 + $0x48] sm:$0xff]
        %v296 = vld [vmem:[%s236 + $0x50] sm:$0xff]
        %v297 = vld [vmem:[%s236 + $0x58] sm:$0xff]
        %v298 = vld [vmem:[%s236 + $0x60] sm:$0xff]
        %v299 = vld [vmem:[%s236 + $0x68] sm:$0xff]
        %v300 = vld [vmem:[%s236 + $0x70] sm:$0xff]
        %v301 = vld [vmem:[%s236 + $0x78] sm:$0xff]
        %v302 = vld [vmem:[%s236 + $0x80] sm:$0xff]
        %v303 = vld [vmem:[%s236 + $0x88] sm:$0xff]
        %v304 = vld [vmem:[%s236 + $0x90] sm:$0xff]
        %v305 = vld [vmem:[%s236 + $0x98] sm:$0xff]
        %v306 = vld [vmem:[%s236 + $0xa0] sm:$0xff]
        %v307 = vld [vmem:[%s236 + $0xa8] sm:$0xff]
        %v308 = vld [vmem:[%s236 + $0xb0] sm:$0xff]
        %v309 = vld [vmem:[%s236 + $0xb8] sm:$0xff]
        %v310 = vld [vmem:[%s236 + $0xc0] sm:$0xff]
        %v311 = vld [vmem:[%s236 + $0xc8] sm:$0xff]
        %v312 = vld [vmem:[%s236 + $0xd0] sm:$0xff]
        %v313 = vld [vmem:[%s236 + $0xd8] sm:$0xff]
        %v314 = vld [vmem:[%s236 + $0xe0] sm:$0xff]
        %v315 = vld [vmem:[%s236 + $0xe8] sm:$0xff]
        %v316 = vld [vmem:[%s236 + $0xf0] sm:$0xff]
        %v317 = vld [vmem:[%s236 + $0xf8] sm:$0xff]
        %v318 = vld [vmem:[%s245] sm:$0xff]
        %v319 = vld [vmem:[%s245 + $0x8] sm:$0xff]
        %v320 = vld [vmem:[%s245 + $0x10] sm:$0xff]
        %v321 = vld [vmem:[%s245 + $0x18] sm:$0xff]
        %v322 = vld [vmem:[%s245 + $0x20] sm:$0xff]
        %v323 = vld [vmem:[%s245 + $0x28] sm:$0xff]
        %v324 = vld [vmem:[%s245 + $0x30] sm:$0xff]
        %v325 = vld [vmem:[%s245 + $0x38] sm:$0xff]
        %v326 = vld [vmem:[%s245 + $0x40] sm:$0xff]
        %v327 = vld [vmem:[%s245 + $0x48] sm:$0xff]
        %v328 = vld [vmem:[%s245 + $0x50] sm:$0xff]
        %v329 = vld [vmem:[%s245 + $0x58] sm:$0xff]
        %v330 = vld [vmem:[%s245 + $0x60] sm:$0xff]
        %v331 = vld [vmem:[%s245 + $0x68] sm:$0xff]
        %v332 = vld [vmem:[%s245 + $0x70] sm:$0xff]
        %v333 = vld [vmem:[%s245 + $0x78] sm:$0xff]
        %v334 = vld [vmem:[%s245 + $0x80] sm:$0xff]
        %v335 = vld [vmem:[%s245 + $0x88] sm:$0xff]
        %v336 = vld [vmem:[%s245 + $0x90] sm:$0xff]
        %v337 = vld [vmem:[%s245 + $0x98] sm:$0xff]
        %v338 = vld [vmem:[%s245 + $0xa0] sm:$0xff]
        %v339 = vld [vmem:[%s245 + $0xa8] sm:$0xff]
        %v340 = vld [vmem:[%s245 + $0xb0] sm:$0xff]
        %v341 = vld [vmem:[%s245 + $0xb8] sm:$0xff]
        %v342 = vld [vmem:[%s245 + $0xc0] sm:$0xff]
        %v343 = vld [vmem:[%s245 + $0xc8] sm:$0xff]
        %v344 = vld [vmem:[%s245 + $0xd0] sm:$0xff]
        %v345 = vld [vmem:[%s245 + $0xd8] sm:$0xff]
        %v346 = vld [vmem:[%s245 + $0xe0] sm:$0xff]
        %v347 = vld [vmem:[%s245 + $0xe8] sm:$0xff]
        %v348 = vld [vmem:[%s245 + $0xf0] sm:$0xff]
        %v349 = vld [vmem:[%s245 + $0xf8] sm:$0xff]
        %v350 = vld [vmem:[#allocation7] sm:$0xff]
        %v351 = vadd.f32 %v286, %v318
        %v352 = vadd.f32 %v287, %v319
        %v353 = vadd.f32 %v288, %v320
        %v354 = vadd.f32 %v289, %v321
        %v355 = vadd.f32 %v290, %v322
        %v356 = vadd.f32 %v291, %v323
        %v357 = vadd.f32 %v292, %v324
        %v358 = vadd.f32 %v293, %v325
        %v359 = vadd.f32 %v294, %v326
        %v360 = vadd.f32 %v295, %v327
        %v361 = vadd.f32 %v296, %v328
        %v362 = vadd.f32 %v297, %v329
        %v363 = vadd.f32 %v298, %v330
        %v364 = vadd.f32 %v299, %v331
        %v365 = vadd.f32 %v300, %v332
        %v366 = vadd.f32 %v301, %v333
        %v367 = vadd.f32 %v302, %v334
        %v368 = vadd.f32 %v303, %v335
        %v369 = vadd.f32 %v304, %v336
        %v370 = vadd.f32 %v305, %v337
        %v371 = vadd.f32 %v306, %v338
        %v372 = vadd.f32 %v307, %v339
        %v373 = vadd.f32 %v308, %v340
        %v374 = vadd.f32 %v309, %v341
        %v375 = vadd.f32 %v310, %v342
        %v376 = vadd.f32 %v311, %v343
        %v377 = vadd.f32 %v312, %v344
        %v378 = vadd.f32 %v313, %v345
        %v379 = vadd.f32 %v314, %v346
        %v380 = vadd.f32 %v315, %v347
        %v381 = vadd.f32 %v316, %v348
        %v382 = vadd.f32 %v317, %v349
        %v383 = vlaneseq
        %v384 = vshrl.u32 %v383, 7
        %v385 = vsub.s32 0, %v384
        %v386 = vrot.slane %v350, %v385
        %v387 = vmul.f32 %v351, %v386
        %v388 = vmul.f32 %v352, %v386
        %v389 = vmul.f32 %v353, %v386
        %v390 = vmul.f32 %v354, %v386
        %v391 = vmul.f32 %v355, %v386
        %v392 = vmul.f32 %v356, %v386
        %v393 = vmul.f32 %v357, %v386
        %v394 = vmul.f32 %v358, %v386
        %v395 = vmul.f32 %v359, %v386
        %v396 = vmul.f32 %v360, %v386
        %v397 = vmul.f32 %v361, %v386
        %v398 = vmul.f32 %v362, %v386
        %v399 = vmul.f32 %v363, %v386
        %v400 = vmul.f32 %v364, %v386
        %v401 = vmul.f32 %v365, %v386
        %v402 = vmul.f32 %v366, %v386
        %v403 = vmul.f32 %v367, %v386
        %v404 = vmul.f32 %v368, %v386
        %v405 = vmul.f32 %v369, %v386
        %v406 = vmul.f32 %v370, %v386
        %v407 = vmul.f32 %v371, %v386
        %v408 = vmul.f32 %v372, %v386
        %v409 = vmul.f32 %v373, %v386
        %v410 = vmul.f32 %v374, %v386
        %v411 = vmul.f32 %v375, %v386
        %v412 = vmul.f32 %v376, %v386
        %v413 = vmul.f32 %v377, %v386
        %v414 = vmul.f32 %v378, %v386
        %v415 = vmul.f32 %v379, %v386
        %v416 = vmul.f32 %v380, %v386
        %v417 = vmul.f32 %v381, %v386
        %v418 = vmul.f32 %v382, %v386
        %v419 = vlaneseq
        %v420 = vshrl.u32 %v419, 7
        %v421 = vsub.s32 1, %v420
        %v422 = vrot.slane %v350, %v421
        %v423 = vadd.f32 %v387, %v422
        %v424 = vadd.f32 %v388, %v422
        %v425 = vadd.f32 %v389, %v422
        %v426 = vadd.f32 %v390, %v422
        %v427 = vadd.f32 %v391, %v422
        %v428 = vadd.f32 %v392, %v422
        %v429 = vadd.f32 %v393, %v422
        %v430 = vadd.f32 %v394, %v422
        %v431 = vadd.f32 %v395, %v422
        %v432 = vadd.f32 %v396, %v422
        %v433 = vadd.f32 %v397, %v422
        %v434 = vadd.f32 %v398, %v422
        %v435 = vadd.f32 %v399, %v422
        %v436 = vadd.f32 %v400, %v422
        %v437 = vadd.f32 %v401, %v422
        %v438 = vadd.f32 %v402, %v422
        %v439 = vadd.f32 %v403, %v422
        %v440 = vadd.f32 %v404, %v422
        %v441 = vadd.f32 %v405, %v422
        %v442 = vadd.f32 %v406, %v422
        %v443 = vadd.f32 %v407, %v422
        %v444 = vadd.f32 %v408, %v422
        %v445 = vadd.f32 %v409, %v422
        %v446 = vadd.f32 %v410, %v422
        %v447 = vadd.f32 %v411, %v422
        %v448 = vadd.f32 %v412, %v422
        %v449 = vadd.f32 %v413, %v422
        %v450 = vadd.f32 %v414, %v422
        %v451 = vadd.f32 %v415, %v422
        %v452 = vadd.f32 %v416, %v422
        %v453 = vadd.f32 %v417, %v422
        %v454 = vadd.f32 %v418, %v422
        %v455 = vmax.f32 %v423, 0.0
        %v456 = vmax.f32 %v424, 0.0
        %v457 = vmax.f32 %v425, 0.0
        %v458 = vmax.f32 %v426, 0.0
        %v459 = vmax.f32 %v427, 0.0
        %v460 = vmax.f32 %v428, 0.0
        %v461 = vmax.f32 %v429, 0.0
        %v462 = vmax.f32 %v430, 0.0
        %v463 = vmax.f32 %v431, 0.0
        %v464 = vmax.f32 %v432, 0.0
        %v465 = vmax.f32 %v433, 0.0
        %v466 = vmax.f32 %v434, 0.0
        %v467 = vmax.f32 %v435, 0.0
        %v468 = vmax.f32 %v436, 0.0
        %v469 = vmax.f32 %v437, 0.0
        %v470 = vmax.f32 %v438, 0.0
        %v471 = vmax.f32 %v439, 0.0
        %v472 = vmax.f32 %v440, 0.0
        %v473 = vmax.f32 %v441, 0.0
        %v474 = vmax.f32 %v442, 0.0
        %v475 = vmax.f32 %v443, 0.0
        %v476 = vmax.f32 %v444, 0.0
        %v477 = vmax.f32 %v445, 0.0
        %v478 = vmax.f32 %v446, 0.0
        %v479 = vmax.f32 %v447, 0.0
        %v480 = vmax.f32 %v448, 0.0
        %v481 = vmax.f32 %v449, 0.0
        %v482 = vmax.f32 %v450, 0.0
        %v483 = vmax.f32 %v451, 0.0
        %v484 = vmax.f32 %v452, 0.0
        %v485 = vmax.f32 %v453, 0.0
        %v486 = vmax.f32 %v454, 0.0
        %v487 = vmul.f32 %v286, %v455
        %v488 = vmul.f32 %v287, %v456
        %v489 = vmul.f32 %v288, %v457
        %v490 = vmul.f32 %v289, %v458
        %v491 = vmul.f32 %v290, %v459
        %v492 = vmul.f32 %v291, %v460
        %v493 = vmul.f32 %v292, %v461
        %v494 = vmul.f32 %v293, %v462
        %v495 = vmul.f32 %v294, %v463
        %v496 = vmul.f32 %v295, %v464
        %v497 = vmul.f32 %v296, %v465
        %v498 = vmul.f32 %v297, %v466
        %v499 = vmul.f32 %v298, %v467
        %v500 = vmul.f32 %v299, %v468
        %v501 = vmul.f32 %v300, %v469
        %v502 = vmul.f32 %v301, %v470
        %v503 = vmul.f32 %v302, %v471
        %v504 = vmul.f32 %v303, %v472
        %v505 = vmul.f32 %v304, %v473
        %v506 = vmul.f32 %v305, %v474
        %v507 = vmul.f32 %v306, %v475
        %v508 = vmul.f32 %v307, %v476
        %v509 = vmul.f32 %v308, %v477
        %v510 = vmul.f32 %v309, %v478
        %v511 = vmul.f32 %v310, %v479
        %v512 = vmul.f32 %v311, %v480
        %v513 = vmul.f32 %v312, %v481
        %v514 = vmul.f32 %v313, %v482
        %v515 = vmul.f32 %v314, %v483
        %v516 = vmul.f32 %v315, %v484
        %v517 = vmul.f32 %v316, %v485
        %v518 = vmul.f32 %v317, %v486
        %v519 = vlaneseq
        %v520 = vshrl.u32 %v519, 7
        %v521 = vsub.s32 4, %v520
        %v522 = vrot.slane %v350, %v521
        %v523 = vadd.f32 %v487, %v522
        %v524 = vadd.f32 %v488, %v522
        %v525 = vadd.f32 %v489, %v522
        %v526 = vadd.f32 %v490, %v522
        %v527 = vadd.f32 %v491, %v522
        %v528 = vadd.f32 %v492, %v522
        %v529 = vadd.f32 %v493, %v522
        %v530 = vadd.f32 %v494, %v522
        %v531 = vadd.f32 %v495, %v522
        %v532 = vadd.f32 %v496, %v522
        %v533 = vadd.f32 %v497, %v522
        %v534 = vadd.f32 %v498, %v522
        %v535 = vadd.f32 %v499, %v522
        %v536 = vadd.f32 %v500, %v522
        %v537 = vadd.f32 %v501, %v522
        %v538 = vadd.f32 %v502, %v522
        %v539 = vadd.f32 %v503, %v522
        %v540 = vadd.f32 %v504, %v522
        %v541 = vadd.f32 %v505, %v522
        %v542 = vadd.f32 %v506, %v522
        %v543 = vadd.f32 %v507, %v522
        %v544 = vadd.f32 %v508, %v522
        %v545 = vadd.f32 %v509, %v522
        %v546 = vadd.f32 %v510, %v522
        %v547 = vadd.f32 %v511, %v522
        %v548 = vadd.f32 %v512, %v522
        %v549 = vadd.f32 %v513, %v522
        %v550 = vadd.f32 %v514, %v522
        %v551 = vadd.f32 %v515, %v522
        %v552 = vadd.f32 %v516, %v522
        %v553 = vadd.f32 %v517, %v522
        %v554 = vadd.f32 %v518, %v522
        %v555 = vadd.f32 %v455, %v455
        %v556 = vadd.f32 %v456, %v456
        %v557 = vadd.f32 %v457, %v457
        %v558 = vadd.f32 %v458, %v458
        %v559 = vadd.f32 %v459, %v459
        %v560 = vadd.f32 %v460, %v460
        %v561 = vadd.f32 %v461, %v461
        %v562 = vadd.f32 %v462, %v462
        %v563 = vadd.f32 %v463, %v463
        %v564 = vadd.f32 %v464, %v464
        %v565 = vadd.f32 %v465, %v465
        %v566 = vadd.f32 %v466, %v466
        %v567 = vadd.f32 %v467, %v467
        %v568 = vadd.f32 %v468, %v468
        %v569 = vadd.f32 %v469, %v469
        %v570 = vadd.f32 %v470, %v470
        %v571 = vadd.f32 %v471, %v471
        %v572 = vadd.f32 %v472, %v472
        %v573 = vadd.f32 %v473, %v473
        %v574 = vadd.f32 %v474, %v474
        %v575 = vadd.f32 %v475, %v475
        %v576 = vadd.f32 %v476, %v476
        %v577 = vadd.f32 %v477, %v477
        %v578 = vadd.f32 %v478, %v478
        %v579 = vadd.f32 %v479, %v479
        %v580 = vadd.f32 %v480, %v480
        %v581 = vadd.f32 %v481, %v481
        %v582 = vadd.f32 %v482, %v482
        %v583 = vadd.f32 %v483, %v483
        %v584 = vadd.f32 %v484, %v484
        %v585 = vadd.f32 %v485, %v485
        %v586 = vadd.f32 %v486, %v486
        %v587 = vlaneseq
        %v588 = vshrl.u32 %v587, 7
        %v589 = vsub.s32 2, %v588
        %v590 = vrot.slane %v350, %v589
        %v591 = vmul.f32 %v555, %v590
        %v592 = vmul.f32 %v556, %v590
        %v593 = vmul.f32 %v557, %v590
        %v594 = vmul.f32 %v558, %v590
        %v595 = vmul.f32 %v559, %v590
        %v596 = vmul.f32 %v560, %v590
        %v597 = vmul.f32 %v561, %v590
        %v598 = vmul.f32 %v562, %v590
        %v599 = vmul.f32 %v563, %v590
        %v600 = vmul.f32 %v564, %v590
        %v601 = vmul.f32 %v565, %v590
        %v602 = vmul.f32 %v566, %v590
        %v603 = vmul.f32 %v567, %v590
        %v604 = vmul.f32 %v568, %v590
        %v605 = vmul.f32 %v569, %v590
        %v606 = vmul.f32 %v570, %v590
        %v607 = vmul.f32 %v571, %v590
        %v608 = vmul.f32 %v572, %v590
        %v609 = vmul.f32 %v573, %v590
        %v610 = vmul.f32 %v574, %v590
        %v611 = vmul.f32 %v575, %v590
        %v612 = vmul.f32 %v576, %v590
        %v613 = vmul.f32 %v577, %v590
        %v614 = vmul.f32 %v578, %v590
        %v615 = vmul.f32 %v579, %v590
        %v616 = vmul.f32 %v580, %v590
        %v617 = vmul.f32 %v581, %v590
        %v618 = vmul.f32 %v582, %v590
        %v619 = vmul.f32 %v583, %v590
        %v620 = vmul.f32 %v584, %v590
        %v621 = vmul.f32 %v585, %v590
        %v622 = vmul.f32 %v586, %v590
        %v623 = vlaneseq
        %v624 = vshrl.u32 %v623, 7
        %v625 = vsub.s32 3, %v624
        %v626 = vrot.slane %v350, %v625
        %v627 = vadd.f32 %v591, %v626
        %v628 = vadd.f32 %v592, %v626
        %v629 = vadd.f32 %v593, %v626
        %v630 = vadd.f32 %v594, %v626
        %v631 = vadd.f32 %v595, %v626
        %v632 = vadd.f32 %v596, %v626
        %v633 = vadd.f32 %v597, %v626
        %v634 = vadd.f32 %v598, %v626
        %v635 = vadd.f32 %v599, %v626
        %v636 = vadd.f32 %v600, %v626
        %v637 = vadd.f32 %v601, %v626
        %v638 = vadd.f32 %v602, %v626
        %v639 = vadd.f32 %v603, %v626
        %v640 = vadd.f32 %v604, %v626
        %v641 = vadd.f32 %v605, %v626
        %v642 = vadd.f32 %v606, %v626
        %v643 = vadd.f32 %v607, %v626
        %v644 = vadd.f32 %v608, %v626
        %v645 = vadd.f32 %v609, %v626
        %v646 = vadd.f32 %v610, %v626
        %v647 = vadd.f32 %v611, %v626
        %v648 = vadd.f32 %v612, %v626
        %v649 = vadd.f32 %v613, %v626
        %v650 = vadd.f32 %v614, %v626
        %v651 = vadd.f32 %v615, %v626
        %v652 = vadd.f32 %v616, %v626
        %v653 = vadd.f32 %v617, %v626
        %v654 = vadd.f32 %v618, %v626
        %v655 = vadd.f32 %v619, %v626
        %v656 = vadd.f32 %v620, %v626
        %v657 = vadd.f32 %v621, %v626
        %v658 = vadd.f32 %v622, %v626
        %v659 = vmax.f32 %v627, 0.0
        %v660 = vmax.f32 %v628, 0.0
        %v661 = vmax.f32 %v629, 0.0
        %v662 = vmax.f32 %v630, 0.0
        %v663 = vmax.f32 %v631, 0.0
        %v664 = vmax.f32 %v632, 0.0
        %v665 = vmax.f32 %v633, 0.0
        %v666 = vmax.f32 %v634, 0.0
        %v667 = vmax.f32 %v635, 0.0
        %v668 = vmax.f32 %v636, 0.0
        %v669 = vmax.f32 %v637, 0.0
        %v670 = vmax.f32 %v638, 0.0
        %v671 = vmax.f32 %v639, 0.0
        %v672 = vmax.f32 %v640, 0.0
        %v673 = vmax.f32 %v641, 0.0
        %v674 = vmax.f32 %v642, 0.0
        %v675 = vmax.f32 %v643, 0.0
        %v676 = vmax.f32 %v644, 0.0
        %v677 = vmax.f32 %v645, 0.0
        %v678 = vmax.f32 %v646, 0.0
        %v679 = vmax.f32 %v647, 0.0
        %v680 = vmax.f32 %v648, 0.0
        %v681 = vmax.f32 %v649, 0.0
        %v682 = vmax.f32 %v650, 0.0
        %v683 = vmax.f32 %v651, 0.0
        %v684 = vmax.f32 %v652, 0.0
        %v685 = vmax.f32 %v653, 0.0
        %v686 = vmax.f32 %v654, 0.0
        %v687 = vmax.f32 %v655, 0.0
        %v688 = vmax.f32 %v656, 0.0
        %v689 = vmax.f32 %v657, 0.0
        %v690 = vmax.f32 %v658, 0.0
        %v691 = vmul.f32 %v523, %v455
        %v692 = vmul.f32 %v524, %v456
        %v693 = vmul.f32 %v525, %v457
        %v694 = vmul.f32 %v526, %v458
        %v695 = vmul.f32 %v527, %v459
        %v696 = vmul.f32 %v528, %v460
        %v697 = vmul.f32 %v529, %v461
        %v698 = vmul.f32 %v530, %v462
        %v699 = vmul.f32 %v531, %v463
        %v700 = vmul.f32 %v532, %v464
        %v701 = vmul.f32 %v533, %v465
        %v702 = vmul.f32 %v534, %v466
        %v703 = vmul.f32 %v535, %v467
        %v704 = vmul.f32 %v536, %v468
        %v705 = vmul.f32 %v537, %v469
        %v706 = vmul.f32 %v538, %v470
        %v707 = vmul.f32 %v539, %v471
        %v708 = vmul.f32 %v540, %v472
        %v709 = vmul.f32 %v541, %v473
        %v710 = vmul.f32 %v542, %v474
        %v711 = vmul.f32 %v543, %v475
        %v712 = vmul.f32 %v544, %v476
        %v713 = vmul.f32 %v545, %v477
        %v714 = vmul.f32 %v546, %v478
        %v715 = vmul.f32 %v547, %v479
        %v716 = vmul.f32 %v548, %v480
        %v717 = vmul.f32 %v549, %v481
        %v718 = vmul.f32 %v550, %v482
        %v719 = vmul.f32 %v551, %v483
        %v720 = vmul.f32 %v552, %v484
        %v721 = vmul.f32 %v553, %v485
        %v722 = vmul.f32 %v554, %v486
        %v723 = vadd.f32 %v659, %v691
        %v724 = vadd.f32 %v660, %v692
        %v725 = vadd.f32 %v661, %v693
        %v726 = vadd.f32 %v662, %v694
        %v727 = vadd.f32 %v663, %v695
        %v728 = vadd.f32 %v664, %v696
        %v729 = vadd.f32 %v665, %v697
        %v730 = vadd.f32 %v666, %v698
        %v731 = vadd.f32 %v667, %v699
        %v732 = vadd.f32 %v668, %v700
        %v733 = vadd.f32 %v669, %v701
        %v734 = vadd.f32 %v670, %v702
        %v735 = vadd.f32 %v671, %v703
        %v736 = vadd.f32 %v672, %v704
        %v737 = vadd.f32 %v673, %v705
        %v738 = vadd.f32 %v674, %v706
        %v739 = vadd.f32 %v675, %v707
        %v740 = vadd.f32 %v676, %v708
        %v741 = vadd.f32 %v677, %v709
        %v742 = vadd.f32 %v678, %v710
        %v743 = vadd.f32 %v679, %v711
        %v744 = vadd.f32 %v680, %v712
        %v745 = vadd.f32 %v681, %v713
        %v746 = vadd.f32 %v682, %v714
        %v747 = vadd.f32 %v683, %v715
        %v748 = vadd.f32 %v684, %v716
        %v749 = vadd.f32 %v685, %v717
        %v750 = vadd.f32 %v686, %v718
        %v751 = vadd.f32 %v687, %v719
        %v752 = vadd.f32 %v688, %v720
        %v753 = vadd.f32 %v689, %v721
        %v754 = vadd.f32 %v690, %v722
        %v755 = vld [vmem:[#allocation8] sm:$0xff]
        %v756 = vld [vmem:[#allocation8 + $0x8] sm:$0xff]
        %v757 = vld [vmem:[#allocation8 + $0x10] sm:$0xff]
        %v758 = vld [vmem:[#allocation8 + $0x18] sm:$0xff]
        %v759 = vld [vmem:[#allocation8 + $0x20] sm:$0xff]
        %v760 = vld [vmem:[#allocation8 + $0x28] sm:$0xff]
        %v761 = vld [vmem:[#allocation8 + $0x30] sm:$0xff]
        %v762 = vld [vmem:[#allocation8 + $0x38] sm:$0xff]
        %v763 = vld [vmem:[#allocation8 + $0x40] sm:$0xff]
        %v764 = vld [vmem:[#allocation8 + $0x48] sm:$0xff]
        %v765 = vld [vmem:[#allocation8 + $0x50] sm:$0xff]
        %v766 = vld [vmem:[#allocation8 + $0x58] sm:$0xff]
        %v767 = vld [vmem:[#allocation8 + $0x60] sm:$0xff]
        %v768 = vld [vmem:[#allocation8 + $0x68] sm:$0xff]
        %v769 = vld [vmem:[#allocation8 + $0x70] sm:$0xff]
        %v770 = vld [vmem:[#allocation8 + $0x78] sm:$0xff]
        %s771 = scalar_lea.vmem [#allocation8], 128
        %v772 = vld [vmem:[%s771] sm:$0xff]
        %v773 = vld [vmem:[%s771 + $0x8] sm:$0xff]
        %v774 = vld [vmem:[%s771 + $0x10] sm:$0xff]
        %v775 = vld [vmem:[%s771 + $0x18] sm:$0xff]
        %v776 = vld [vmem:[%s771 + $0x20] sm:$0xff]
        %v777 = vld [vmem:[%s771 + $0x28] sm:$0xff]
        %v778 = vld [vmem:[%s771 + $0x30] sm:$0xff]
        %v779 = vld [vmem:[%s771 + $0x38] sm:$0xff]
        %v780 = vld [vmem:[%s771 + $0x40] sm:$0xff]
        %v781 = vld [vmem:[%s771 + $0x48] sm:$0xff]
        %v782 = vld [vmem:[%s771 + $0x50] sm:$0xff]
        %v783 = vld [vmem:[%s771 + $0x58] sm:$0xff]
        %v784 = vld [vmem:[%s771 + $0x60] sm:$0xff]
        %v785 = vld [vmem:[%s771 + $0x68] sm:$0xff]
        %v786 = vld [vmem:[%s771 + $0x70] sm:$0xff]
        %v787 = vld [vmem:[%s771 + $0x78] sm:$0xff]
        %788 = vmatprep.subr.mxu0 0.0
        %789 = vmatpush1.msra.mxu0 %v787
        %790 = vmatprep.subr.mxu0 0.0
        %791 = vmatpush1.msra.mxu0 %v786
        %792 = vmatprep.subr.mxu0 0.0
        %793 = vmatpush1.msra.mxu0 %v785
        %794 = vmatprep.subr.mxu0 0.0
        %795 = vmatpush1.msra.mxu0 %v784
        %796 = vmatprep.subr.mxu0 0.0
        %797 = vmatpush1.msra.mxu0 %v783
        %798 = vmatprep.subr.mxu0 0.0
        %799 = vmatpush1.msra.mxu0 %v782
        %800 = vmatprep.subr.mxu0 0.0
        %801 = vmatpush1.msra.mxu0 %v781
        %802 = vmatprep.subr.mxu0 0.0
        %803 = vmatpush1.msra.mxu0 %v780
        %804 = vmatprep.subr.mxu0 0.0
        %805 = vmatpush1.msra.mxu0 %v779
        %806 = vmatprep.subr.mxu0 0.0
        %807 = vmatpush1.msra.mxu0 %v778
        %808 = vmatprep.subr.mxu0 0.0
        %809 = vmatpush1.msra.mxu0 %v777
        %810 = vmatprep.subr.mxu0 0.0
        %811 = vmatpush1.msra.mxu0 %v776
        %812 = vmatprep.subr.mxu0 0.0
        %813 = vmatpush1.msra.mxu0 %v775
        %814 = vmatprep.subr.mxu0 0.0
        %815 = vmatpush1.msra.mxu0 %v774
        %816 = vmatprep.subr.mxu0 0.0
        %817 = vmatpush1.msra.mxu0 %v773
        %818 = vmatprep.subr.mxu0 0.0
        %819 = vmatpush1.msra.mxu0 %v772
        %820 = vmatprep.subr.mxu0 0.0
        %821 = vmatpush2.msra.mxu0 0.0
        %822 = vmatprep.subr.mxu0 0.0
        %823 = vmatpush2.msra.mxu0 0.0
        %824 = vmatprep.subr.mxu0 0.0
        %825 = vmatpush2.msra.mxu0 0.0
        %826 = vmatprep.subr.mxu0 0.0
        %827 = vmatpush2.msra.mxu0 0.0
        %828 = vmatprep.subr.mxu0 0.0
        %829 = vmatpush2.msra.mxu0 0.0
        %830 = vmatprep.subr.mxu0 0.0
        %831 = vmatpush2.msra.mxu0 0.0
        %832 = vmatprep.subr.mxu0 0.0
        %833 = vmatpush2.msra.mxu0 0.0
        %834 = vmatprep.subr.mxu0 0.0
        %835 = vmatpush2.msra.mxu0 0.0
        %836 = vmatprep.subr.mxu0 0.0
        %837 = vmatpush2.msra.mxu0 0.0
        %838 = vmatprep.subr.mxu0 0.0
        %839 = vmatpush2.msra.mxu0 0.0
        %840 = vmatprep.subr.mxu0 0.0
        %841 = vmatpush2.msra.mxu0 0.0
        %842 = vmatprep.subr.mxu0 0.0
        %843 = vmatpush2.msra.mxu0 0.0
        %844 = vmatprep.subr.mxu0 0.0
        %845 = vmatpush2.msra.mxu0 0.0
        %846 = vmatprep.subr.mxu0 0.0
        %847 = vmatpush2.msra.mxu0 0.0
        %848 = vmatprep.subr.mxu0 0.0
        %849 = vmatpush2.msra.mxu0 0.0
        %850 = vmatprep.subr.mxu0 0.0
        %851 = vmatpush2.msra.mxu0 0.0
        %852 = vmatprep.mubr.f32.mxu0 0.0
        %853 = vmatmul.mubr.f32.gmra.mxu0 %v523
        %v854 = vpop.f32.mrf.mxu0
        %v855 = vadd.f32 0.0, %v854
        %v856 = vpop.f32.mrf.mxu0
        %857 = vmatprep.mubr.f32.mxu0 0.0
        %858 = vmatmul.mubr.f32.gmra.mxu0 %v524
        %v859 = vpop.f32.mrf.mxu0
        %v860 = vadd.f32 0.0, %v859
        %v861 = vpop.f32.mrf.mxu0
        %862 = vmatprep.mubr.f32.mxu0 0.0
        %863 = vmatmul.mubr.f32.gmra.mxu0 %v525
        %v864 = vpop.f32.mrf.mxu0
        %v865 = vadd.f32 0.0, %v864
        %v866 = vpop.f32.mrf.mxu0
        %867 = vmatprep.mubr.f32.mxu0 0.0
        %868 = vmatmul.mubr.f32.gmra.mxu0 %v526
        %v869 = vpop.f32.mrf.mxu0
        %v870 = vadd.f32 0.0, %v869
        %v871 = vpop.f32.mrf.mxu0
        %872 = vmatprep.mubr.f32.mxu0 0.0
        %873 = vmatmul.mubr.f32.gmra.mxu0 %v527
        %v874 = vpop.f32.mrf.mxu0
        %v875 = vadd.f32 0.0, %v874
        %v876 = vpop.f32.mrf.mxu0
        %877 = vmatprep.mubr.f32.mxu0 0.0
        %878 = vmatmul.mubr.f32.gmra.mxu0 %v528
        %v879 = vpop.f32.mrf.mxu0
        %v880 = vadd.f32 0.0, %v879
        %v881 = vpop.f32.mrf.mxu0
        %882 = vmatprep.mubr.f32.mxu0 0.0
        %883 = vmatmul.mubr.f32.gmra.mxu0 %v529
        %v884 = vpop.f32.mrf.mxu0
        %v885 = vadd.f32 0.0, %v884
        %v886 = vpop.f32.mrf.mxu0
        %887 = vmatprep.mubr.f32.mxu0 0.0
        %888 = vmatmul.mubr.f32.gmra.mxu0 %v530
        %v889 = vpop.f32.mrf.mxu0
        %v890 = vadd.f32 0.0, %v889
        %v891 = vpop.f32.mrf.mxu0
        %892 = vmatprep.mubr.f32.mxu0 0.0
        %893 = vmatmul.mubr.f32.gmra.mxu0 %v531
        %v894 = vpop.f32.mrf.mxu0
        %v895 = vadd.f32 0.0, %v894
        %v896 = vpop.f32.mrf.mxu0
        %897 = vmatprep.mubr.f32.mxu0 0.0
        %898 = vmatmul.mubr.f32.gmra.mxu0 %v532
        %v899 = vpop.f32.mrf.mxu0
        %v900 = vadd.f32 0.0, %v899
        %v901 = vpop.f32.mrf.mxu0
        %902 = vmatprep.mubr.f32.mxu0 0.0
        %903 = vmatmul.mubr.f32.gmra.mxu0 %v533
        %v904 = vpop.f32.mrf.mxu0
        %v905 = vadd.f32 0.0, %v904
        %v906 = vpop.f32.mrf.mxu0
        %907 = vmatprep.mubr.f32.mxu0 0.0
        %908 = vmatmul.mubr.f32.gmra.mxu0 %v534
        %v909 = vpop.f32.mrf.mxu0
        %v910 = vadd.f32 0.0, %v909
        %v911 = vpop.f32.mrf.mxu0
        %912 = vmatprep.mubr.f32.mxu0 0.0
        %913 = vmatmul.mubr.f32.gmra.mxu0 %v535
        %v914 = vpop.f32.mrf.mxu0
        %v915 = vadd.f32 0.0, %v914
        %v916 = vpop.f32.mrf.mxu0
        %917 = vmatprep.mubr.f32.mxu0 0.0
        %918 = vmatmul.mubr.f32.gmra.mxu0 %v536
        %v919 = vpop.f32.mrf.mxu0
        %v920 = vadd.f32 0.0, %v919
        %v921 = vpop.f32.mrf.mxu0
        %922 = vmatprep.mubr.f32.mxu0 0.0
        %923 = vmatmul.mubr.f32.gmra.mxu0 %v537
        %v924 = vpop.f32.mrf.mxu0
        %v925 = vadd.f32 0.0, %v924
        %v926 = vpop.f32.mrf.mxu0
        %927 = vmatprep.mubr.f32.mxu0 0.0
        %928 = vmatmul.mubr.f32.gmra.mxu0 %v538
        %v929 = vpop.f32.mrf.mxu0
        %v930 = vadd.f32 0.0, %v929
        %v931 = vpop.f32.mrf.mxu0
        %932 = vmatprep.mubr.f32.mxu0 0.0
        %933 = vmatmul.mubr.f32.gmra.mxu0 %v539
        %v934 = vpop.f32.mrf.mxu0
        %v935 = vadd.f32 0.0, %v934
        %v936 = vpop.f32.mrf.mxu0
        %937 = vmatprep.mubr.f32.mxu0 0.0
        %938 = vmatmul.mubr.f32.gmra.mxu0 %v540
        %v939 = vpop.f32.mrf.mxu0
        %v940 = vadd.f32 0.0, %v939
        %v941 = vpop.f32.mrf.mxu0
        %942 = vmatprep.mubr.f32.mxu0 0.0
        %943 = vmatmul.mubr.f32.gmra.mxu0 %v541
        %v944 = vpop.f32.mrf.mxu0
        %v945 = vadd.f32 0.0, %v944
        %v946 = vpop.f32.mrf.mxu0
        %947 = vmatprep.mubr.f32.mxu0 0.0
        %948 = vmatmul.mubr.f32.gmra.mxu0 %v542
        %v949 = vpop.f32.mrf.mxu0
        %v950 = vadd.f32 0.0, %v949
        %v951 = vpop.f32.mrf.mxu0
        %952 = vmatprep.mubr.f32.mxu0 0.0
        %953 = vmatmul.mubr.f32.gmra.mxu0 %v543
        %v954 = vpop.f32.mrf.mxu0
        %v955 = vadd.f32 0.0, %v954
        %v956 = vpop.f32.mrf.mxu0
        %957 = vmatprep.mubr.f32.mxu0 0.0
        %958 = vmatmul.mubr.f32.gmra.mxu0 %v544
        %v959 = vpop.f32.mrf.mxu0
        %v960 = vadd.f32 0.0, %v959
        %v961 = vpop.f32.mrf.mxu0
        %962 = vmatprep.mubr.f32.mxu0 0.0
        %963 = vmatmul.mubr.f32.gmra.mxu0 %v545
        %v964 = vpop.f32.mrf.mxu0
        %v965 = vadd.f32 0.0, %v964
        %v966 = vpop.f32.mrf.mxu0
        %967 = vmatprep.mubr.f32.mxu0 0.0
        %968 = vmatmul.mubr.f32.gmra.mxu0 %v546
        %v969 = vpop.f32.mrf.mxu0
        %v970 = vadd.f32 0.0, %v969
        %v971 = vpop.f32.mrf.mxu0
        %972 = vmatprep.mubr.f32.mxu0 0.0
        %973 = vmatmul.mubr.f32.gmra.mxu0 %v547
        %v974 = vpop.f32.mrf.mxu0
        %v975 = vadd.f32 0.0, %v974
        %v976 = vpop.f32.mrf.mxu0
        %977 = vmatprep.mubr.f32.mxu0 0.0
        %978 = vmatmul.mubr.f32.gmra.mxu0 %v548
        %v979 = vpop.f32.mrf.mxu0
        %v980 = vadd.f32 0.0, %v979
        %v981 = vpop.f32.mrf.mxu0
        %982 = vmatprep.mubr.f32.mxu0 0.0
        %983 = vmatmul.mubr.f32.gmra.mxu0 %v549
        %v984 = vpop.f32.mrf.mxu0
        %v985 = vadd.f32 0.0, %v984
        %v986 = vpop.f32.mrf.mxu0
        %987 = vmatprep.mubr.f32.mxu0 0.0
        %988 = vmatmul.mubr.f32.gmra.mxu0 %v550
        %v989 = vpop.f32.mrf.mxu0
        %v990 = vadd.f32 0.0, %v989
        %v991 = vpop.f32.mrf.mxu0
        %992 = vmatprep.mubr.f32.mxu0 0.0
        %993 = vmatmul.mubr.f32.gmra.mxu0 %v551
        %v994 = vpop.f32.mrf.mxu0
        %v995 = vadd.f32 0.0, %v994
        %v996 = vpop.f32.mrf.mxu0
        %997 = vmatprep.mubr.f32.mxu0 0.0
        %998 = vmatmul.mubr.f32.gmra.mxu0 %v552
        %v999 = vpop.f32.mrf.mxu0
        %v1000 = vadd.f32 0.0, %v999
        %v1001 = vpop.f32.mrf.mxu0
        %1002 = vmatprep.mubr.f32.mxu0 0.0
        %1003 = vmatmul.mubr.f32.gmra.mxu0 %v553
        %v1004 = vpop.f32.mrf.mxu0
        %v1005 = vadd.f32 0.0, %v1004
        %v1006 = vpop.f32.mrf.mxu0
        %1007 = vmatprep.mubr.f32.mxu0 0.0
        %1008 = vmatmul.mubr.f32.gmra.mxu0 %v554
        %v1009 = vpop.f32.mrf.mxu0
        %v1010 = vadd.f32 0.0, %v1009
        %v1011 = vpop.f32.mrf.mxu0
        %1012 = vdwg.mxu0
        %1013 = vmatprep.subr.mxu0 0.0
        %1014 = vmatpush1.msra.mxu0 %v770
        %1015 = vmatprep.subr.mxu0 0.0
        %1016 = vmatpush1.msra.mxu0 %v769
        %1017 = vmatprep.subr.mxu0 0.0
        %1018 = vmatpush1.msra.mxu0 %v768
        %1019 = vmatprep.subr.mxu0 0.0
        %1020 = vmatpush1.msra.mxu0 %v767
        %1021 = vmatprep.subr.mxu0 0.0
        %1022 = vmatpush1.msra.mxu0 %v766
        %1023 = vmatprep.subr.mxu0 0.0
        %1024 = vmatpush1.msra.mxu0 %v765
        %1025 = vmatprep.subr.mxu0 0.0
        %1026 = vmatpush1.msra.mxu0 %v764
        %1027 = vmatprep.subr.mxu0 0.0
        %1028 = vmatpush1.msra.mxu0 %v763
        %1029 = vmatprep.subr.mxu0 0.0
        %1030 = vmatpush1.msra.mxu0 %v762
        %1031 = vmatprep.subr.mxu0 0.0
        %1032 = vmatpush1.msra.mxu0 %v761
        %1033 = vmatprep.subr.mxu0 0.0
        %1034 = vmatpush1.msra.mxu0 %v760
        %1035 = vmatprep.subr.mxu0 0.0
        %1036 = vmatpush1.msra.mxu0 %v759
        %1037 = vmatprep.subr.mxu0 0.0
        %1038 = vmatpush1.msra.mxu0 %v758
        %1039 = vmatprep.subr.mxu0 0.0
        %1040 = vmatpush1.msra.mxu0 %v757
        %1041 = vmatprep.subr.mxu0 0.0
        %1042 = vmatpush1.msra.mxu0 %v756
        %1043 = vmatprep.subr.mxu0 0.0
        %1044 = vmatpush1.msra.mxu0 %v755
        %1045 = vmatprep.subr.mxu0 0.0
        %1046 = vmatpush2.msra.mxu0 0.0
        %1047 = vmatprep.subr.mxu0 0.0
        %1048 = vmatpush2.msra.mxu0 0.0
        %1049 = vmatprep.subr.mxu0 0.0
        %1050 = vmatpush2.msra.mxu0 0.0
        %1051 = vmatprep.subr.mxu0 0.0
        %1052 = vmatpush2.msra.mxu0 0.0
        %1053 = vmatprep.subr.mxu0 0.0
        %1054 = vmatpush2.msra.mxu0 0.0
        %1055 = vmatprep.subr.mxu0 0.0
        %1056 = vmatpush2.msra.mxu0 0.0
        %1057 = vmatprep.subr.mxu0 0.0
        %1058 = vmatpush2.msra.mxu0 0.0
        %1059 = vmatprep.subr.mxu0 0.0
        %1060 = vmatpush2.msra.mxu0 0.0
        %1061 = vmatprep.subr.mxu0 0.0
        %1062 = vmatpush2.msra.mxu0 0.0
        %1063 = vmatprep.subr.mxu0 0.0
        %1064 = vmatpush2.msra.mxu0 0.0
        %1065 = vmatprep.subr.mxu0 0.0
        %1066 = vmatpush2.msra.mxu0 0.0
        %1067 = vmatprep.subr.mxu0 0.0
        %1068 = vmatpush2.msra.mxu0 0.0
        %1069 = vmatprep.subr.mxu0 0.0
        %1070 = vmatpush2.msra.mxu0 0.0
        %1071 = vmatprep.subr.mxu0 0.0
        %1072 = vmatpush2.msra.mxu0 0.0
        %1073 = vmatprep.subr.mxu0 0.0
        %1074 = vmatpush2.msra.mxu0 0.0
        %1075 = vmatprep.subr.mxu0 0.0
        %1076 = vmatpush2.msra.mxu0 0.0
        %1077 = vmatprep.mubr.f32.mxu0 0.0
        %1078 = vmatmul.mubr.f32.gmra.mxu0 %v455
        %v1079 = vpop.f32.mrf.mxu0
        %v1080 = vadd.f32 %v855, %v1079
        %v1081 = vpop.f32.mrf.mxu0
        %1082 = vmatprep.mubr.f32.mxu0 0.0
        %1083 = vmatmul.mubr.f32.gmra.mxu0 %v456
        %v1084 = vpop.f32.mrf.mxu0
        %v1085 = vadd.f32 %v860, %v1084
        %v1086 = vpop.f32.mrf.mxu0
        %1087 = vmatprep.mubr.f32.mxu0 0.0
        %1088 = vmatmul.mubr.f32.gmra.mxu0 %v457
        %v1089 = vpop.f32.mrf.mxu0
        %v1090 = vadd.f32 %v865, %v1089
        %v1091 = vpop.f32.mrf.mxu0
        %1092 = vmatprep.mubr.f32.mxu0 0.0
        %1093 = vmatmul.mubr.f32.gmra.mxu0 %v458
        %v1094 = vpop.f32.mrf.mxu0
        %v1095 = vadd.f32 %v870, %v1094
        %v1096 = vpop.f32.mrf.mxu0
        %1097 = vmatprep.mubr.f32.mxu0 0.0
        %1098 = vmatmul.mubr.f32.gmra.mxu0 %v459
        %v1099 = vpop.f32.mrf.mxu0
        %v1100 = vadd.f32 %v875, %v1099
        %v1101 = vpop.f32.mrf.mxu0
        %1102 = vmatprep.mubr.f32.mxu0 0.0
        %1103 = vmatmul.mubr.f32.gmra.mxu0 %v460
        %v1104 = vpop.f32.mrf.mxu0
        %v1105 = vadd.f32 %v880, %v1104
        %v1106 = vpop.f32.mrf.mxu0
        %1107 = vmatprep.mubr.f32.mxu0 0.0
        %1108 = vmatmul.mubr.f32.gmra.mxu0 %v461
        %v1109 = vpop.f32.mrf.mxu0
        %v1110 = vadd.f32 %v885, %v1109
        %v1111 = vpop.f32.mrf.mxu0
        %1112 = vmatprep.mubr.f32.mxu0 0.0
        %1113 = vmatmul.mubr.f32.gmra.mxu0 %v462
        %v1114 = vpop.f32.mrf.mxu0
        %v1115 = vadd.f32 %v890, %v1114
        %v1116 = vpop.f32.mrf.mxu0
        %1117 = vmatprep.mubr.f32.mxu0 0.0
        %1118 = vmatmul.mubr.f32.gmra.mxu0 %v463
        %v1119 = vpop.f32.mrf.mxu0
        %v1120 = vadd.f32 %v895, %v1119
        %v1121 = vpop.f32.mrf.mxu0
        %1122 = vmatprep.mubr.f32.mxu0 0.0
        %1123 = vmatmul.mubr.f32.gmra.mxu0 %v464
        %v1124 = vpop.f32.mrf.mxu0
        %v1125 = vadd.f32 %v900, %v1124
        %v1126 = vpop.f32.mrf.mxu0
        %1127 = vmatprep.mubr.f32.mxu0 0.0
        %1128 = vmatmul.mubr.f32.gmra.mxu0 %v465
        %v1129 = vpop.f32.mrf.mxu0
        %v1130 = vadd.f32 %v905, %v1129
        %v1131 = vpop.f32.mrf.mxu0
        %1132 = vmatprep.mubr.f32.mxu0 0.0
        %1133 = vmatmul.mubr.f32.gmra.mxu0 %v466
        %v1134 = vpop.f32.mrf.mxu0
        %v1135 = vadd.f32 %v910, %v1134
        %v1136 = vpop.f32.mrf.mxu0
        %1137 = vmatprep.mubr.f32.mxu0 0.0
        %1138 = vmatmul.mubr.f32.gmra.mxu0 %v467
        %v1139 = vpop.f32.mrf.mxu0
        %v1140 = vadd.f32 %v915, %v1139
        %v1141 = vpop.f32.mrf.mxu0
        %1142 = vmatprep.mubr.f32.mxu0 0.0
        %1143 = vmatmul.mubr.f32.gmra.mxu0 %v468
        %v1144 = vpop.f32.mrf.mxu0
        %v1145 = vadd.f32 %v920, %v1144
        %v1146 = vpop.f32.mrf.mxu0
        %1147 = vmatprep.mubr.f32.mxu0 0.0
        %1148 = vmatmul.mubr.f32.gmra.mxu0 %v469
        %v1149 = vpop.f32.mrf.mxu0
        %v1150 = vadd.f32 %v925, %v1149
        %v1151 = vpop.f32.mrf.mxu0
        %1152 = vmatprep.mubr.f32.mxu0 0.0
        %1153 = vmatmul.mubr.f32.gmra.mxu0 %v470
        %v1154 = vpop.f32.mrf.mxu0
        %v1155 = vadd.f32 %v930, %v1154
        %v1156 = vpop.f32.mrf.mxu0
        %1157 = vmatprep.mubr.f32.mxu0 0.0
        %1158 = vmatmul.mubr.f32.gmra.mxu0 %v471
        %v1159 = vpop.f32.mrf.mxu0
        %v1160 = vadd.f32 %v935, %v1159
        %v1161 = vpop.f32.mrf.mxu0
        %1162 = vmatprep.mubr.f32.mxu0 0.0
        %1163 = vmatmul.mubr.f32.gmra.mxu0 %v472
        %v1164 = vpop.f32.mrf.mxu0
        %v1165 = vadd.f32 %v940, %v1164
        %v1166 = vpop.f32.mrf.mxu0
        %1167 = vmatprep.mubr.f32.mxu0 0.0
        %1168 = vmatmul.mubr.f32.gmra.mxu0 %v473
        %v1169 = vpop.f32.mrf.mxu0
        %v1170 = vadd.f32 %v945, %v1169
        %v1171 = vpop.f32.mrf.mxu0
        %1172 = vmatprep.mubr.f32.mxu0 0.0
        %1173 = vmatmul.mubr.f32.gmra.mxu0 %v474
        %v1174 = vpop.f32.mrf.mxu0
        %v1175 = vadd.f32 %v950, %v1174
        %v1176 = vpop.f32.mrf.mxu0
        %1177 = vmatprep.mubr.f32.mxu0 0.0
        %1178 = vmatmul.mubr.f32.gmra.mxu0 %v475
        %v1179 = vpop.f32.mrf.mxu0
        %v1180 = vadd.f32 %v955, %v1179
        %v1181 = vpop.f32.mrf.mxu0
        %1182 = vmatprep.mubr.f32.mxu0 0.0
        %1183 = vmatmul.mubr.f32.gmra.mxu0 %v476
        %v1184 = vpop.f32.mrf.mxu0
        %v1185 = vadd.f32 %v960, %v1184
        %v1186 = vpop.f32.mrf.mxu0
        %1187 = vmatprep.mubr.f32.mxu0 0.0
        %1188 = vmatmul.mubr.f32.gmra.mxu0 %v477
        %v1189 = vpop.f32.mrf.mxu0
        %v1190 = vadd.f32 %v965, %v1189
        %v1191 = vpop.f32.mrf.mxu0
        %1192 = vmatprep.mubr.f32.mxu0 0.0
        %1193 = vmatmul.mubr.f32.gmra.mxu0 %v478
        %v1194 = vpop.f32.mrf.mxu0
        %v1195 = vadd.f32 %v970, %v1194
        %v1196 = vpop.f32.mrf.mxu0
        %1197 = vmatprep.mubr.f32.mxu0 0.0
        %1198 = vmatmul.mubr.f32.gmra.mxu0 %v479
        %v1199 = vpop.f32.mrf.mxu0
        %v1200 = vadd.f32 %v975, %v1199
        %v1201 = vpop.f32.mrf.mxu0
        %1202 = vmatprep.mubr.f32.mxu0 0.0
        %1203 = vmatmul.mubr.f32.gmra.mxu0 %v480
        %v1204 = vpop.f32.mrf.mxu0
        %v1205 = vadd.f32 %v980, %v1204
        %v1206 = vpop.f32.mrf.mxu0
        %1207 = vmatprep.mubr.f32.mxu0 0.0
        %1208 = vmatmul.mubr.f32.gmra.mxu0 %v481
        %v1209 = vpop.f32.mrf.mxu0
        %v1210 = vadd.f32 %v985, %v1209
        %v1211 = vpop.f32.mrf.mxu0
        %1212 = vmatprep.mubr.f32.mxu0 0.0
        %1213 = vmatmul.mubr.f32.gmra.mxu0 %v482
        %v1214 = vpop.f32.mrf.mxu0
        %v1215 = vadd.f32 %v990, %v1214
        %v1216 = vpop.f32.mrf.mxu0
        %1217 = vmatprep.mubr.f32.mxu0 0.0
        %1218 = vmatmul.mubr.f32.gmra.mxu0 %v483
        %v1219 = vpop.f32.mrf.mxu0
        %v1220 = vadd.f32 %v995, %v1219
        %v1221 = vpop.f32.mrf.mxu0
        %1222 = vmatprep.mubr.f32.mxu0 0.0
        %1223 = vmatmul.mubr.f32.gmra.mxu0 %v484
        %v1224 = vpop.f32.mrf.mxu0
        %v1225 = vadd.f32 %v1000, %v1224
        %v1226 = vpop.f32.mrf.mxu0
        %1227 = vmatprep.mubr.f32.mxu0 0.0
        %1228 = vmatmul.mubr.f32.gmra.mxu0 %v485
        %v1229 = vpop.f32.mrf.mxu0
        %v1230 = vadd.f32 %v1005, %v1229
        %v1231 = vpop.f32.mrf.mxu0
        %1232 = vmatprep.mubr.f32.mxu0 0.0
        %1233 = vmatmul.mubr.f32.gmra.mxu0 %v486
        %v1234 = vpop.f32.mrf.mxu0
        %v1235 = vadd.f32 %v1010, %v1234
        %v1236 = vpop.f32.mrf.mxu0
        %1237 = vdwg.mxu0
        %s1238 = scalar_lea.vmem [#allocation8], 256
        %v1239 = vld [vmem:[%s1238] sm:$0xff]
        %v1240 = vld [vmem:[%s1238 + $0x8] sm:$0xff]
        %v1241 = vld [vmem:[%s1238 + $0x10] sm:$0xff]
        %v1242 = vld [vmem:[%s1238 + $0x18] sm:$0xff]
        %v1243 = vld [vmem:[%s1238 + $0x20] sm:$0xff]
        %v1244 = vld [vmem:[%s1238 + $0x28] sm:$0xff]
        %v1245 = vld [vmem:[%s1238 + $0x30] sm:$0xff]
        %v1246 = vld [vmem:[%s1238 + $0x38] sm:$0xff]
        %v1247 = vld [vmem:[%s1238 + $0x40] sm:$0xff]
        %v1248 = vld [vmem:[%s1238 + $0x48] sm:$0xff]
        %v1249 = vld [vmem:[%s1238 + $0x50] sm:$0xff]
        %v1250 = vld [vmem:[%s1238 + $0x58] sm:$0xff]
        %v1251 = vld [vmem:[%s1238 + $0x60] sm:$0xff]
        %v1252 = vld [vmem:[%s1238 + $0x68] sm:$0xff]
        %v1253 = vld [vmem:[%s1238 + $0x70] sm:$0xff]
        %v1254 = vld [vmem:[%s1238 + $0x78] sm:$0xff]
        %1255 = vmatprep.subr.mxu0 0.0
        %1256 = vmatpush1.msra.mxu0 %v1254
        %1257 = vmatprep.subr.mxu0 0.0
        %1258 = vmatpush1.msra.mxu0 %v1253
        %1259 = vmatprep.subr.mxu0 0.0
        %1260 = vmatpush1.msra.mxu0 %v1252
        %1261 = vmatprep.subr.mxu0 0.0
        %1262 = vmatpush1.msra.mxu0 %v1251
        %1263 = vmatprep.subr.mxu0 0.0
        %1264 = vmatpush1.msra.mxu0 %v1250
        %1265 = vmatprep.subr.mxu0 0.0
        %1266 = vmatpush1.msra.mxu0 %v1249
        %1267 = vmatprep.subr.mxu0 0.0
        %1268 = vmatpush1.msra.mxu0 %v1248
        %1269 = vmatprep.subr.mxu0 0.0
        %1270 = vmatpush1.msra.mxu0 %v1247
        %1271 = vmatprep.subr.mxu0 0.0
        %1272 = vmatpush1.msra.mxu0 %v1246
        %1273 = vmatprep.subr.mxu0 0.0
        %1274 = vmatpush1.msra.mxu0 %v1245
        %1275 = vmatprep.subr.mxu0 0.0
        %1276 = vmatpush1.msra.mxu0 %v1244
        %1277 = vmatprep.subr.mxu0 0.0
        %1278 = vmatpush1.msra.mxu0 %v1243
        %1279 = vmatprep.subr.mxu0 0.0
        %1280 = vmatpush1.msra.mxu0 %v1242
        %1281 = vmatprep.subr.mxu0 0.0
        %1282 = vmatpush1.msra.mxu0 %v1241
        %1283 = vmatprep.subr.mxu0 0.0
        %1284 = vmatpush1.msra.mxu0 %v1240
        %1285 = vmatprep.subr.mxu0 0.0
        %1286 = vmatpush1.msra.mxu0 %v1239
        %1287 = vmatprep.subr.mxu0 0.0
        %1288 = vmatpush2.msra.mxu0 0.0
        %1289 = vmatprep.subr.mxu0 0.0
        %1290 = vmatpush2.msra.mxu0 0.0
        %1291 = vmatprep.subr.mxu0 0.0
        %1292 = vmatpush2.msra.mxu0 0.0
        %1293 = vmatprep.subr.mxu0 0.0
        %1294 = vmatpush2.msra.mxu0 0.0
        %1295 = vmatprep.subr.mxu0 0.0
        %1296 = vmatpush2.msra.mxu0 0.0
        %1297 = vmatprep.subr.mxu0 0.0
        %1298 = vmatpush2.msra.mxu0 0.0
        %1299 = vmatprep.subr.mxu0 0.0
        %1300 = vmatpush2.msra.mxu0 0.0
        %1301 = vmatprep.subr.mxu0 0.0
        %1302 = vmatpush2.msra.mxu0 0.0
        %1303 = vmatprep.subr.mxu0 0.0
        %1304 = vmatpush2.msra.mxu0 0.0
        %1305 = vmatprep.subr.mxu0 0.0
        %1306 = vmatpush2.msra.mxu0 0.0
        %1307 = vmatprep.subr.mxu0 0.0
        %1308 = vmatpush2.msra.mxu0 0.0
        %1309 = vmatprep.subr.mxu0 0.0
        %1310 = vmatpush2.msra.mxu0 0.0
        %1311 = vmatprep.subr.mxu0 0.0
        %1312 = vmatpush2.msra.mxu0 0.0
        %1313 = vmatprep.subr.mxu0 0.0
        %1314 = vmatpush2.msra.mxu0 0.0
        %1315 = vmatprep.subr.mxu0 0.0
        %1316 = vmatpush2.msra.mxu0 0.0
        %1317 = vmatprep.subr.mxu0 0.0
        %1318 = vmatpush2.msra.mxu0 0.0
        %1319 = vmatprep.mubr.f32.mxu0 0.0
        %1320 = vmatmul.mubr.f32.gmra.mxu0 %v723
        %v1321 = vpop.f32.mrf.mxu0
        %v1322 = vadd.f32 0.0, %v1321
        %v1323 = vpop.f32.mrf.mxu0
        %1324 = vmatprep.mubr.f32.mxu0 0.0
        %1325 = vmatmul.mubr.f32.gmra.mxu0 %v724
        %v1326 = vpop.f32.mrf.mxu0
        %v1327 = vadd.f32 0.0, %v1326
        %v1328 = vpop.f32.mrf.mxu0
        %1329 = vmatprep.mubr.f32.mxu0 0.0
        %1330 = vmatmul.mubr.f32.gmra.mxu0 %v725
        %v1331 = vpop.f32.mrf.mxu0
        %v1332 = vadd.f32 0.0, %v1331
        %v1333 = vpop.f32.mrf.mxu0
        %1334 = vmatprep.mubr.f32.mxu0 0.0
        %1335 = vmatmul.mubr.f32.gmra.mxu0 %v726
        %v1336 = vpop.f32.mrf.mxu0
        %v1337 = vadd.f32 0.0, %v1336
        %v1338 = vpop.f32.mrf.mxu0
        %1339 = vmatprep.mubr.f32.mxu0 0.0
        %1340 = vmatmul.mubr.f32.gmra.mxu0 %v727
        %v1341 = vpop.f32.mrf.mxu0
        %v1342 = vadd.f32 0.0, %v1341
        %v1343 = vpop.f32.mrf.mxu0
        %1344 = vmatprep.mubr.f32.mxu0 0.0
        %1345 = vmatmul.mubr.f32.gmra.mxu0 %v728
        %v1346 = vpop.f32.mrf.mxu0
        %v1347 = vadd.f32 0.0, %v1346
        %v1348 = vpop.f32.mrf.mxu0
        %1349 = vmatprep.mubr.f32.mxu0 0.0
        %1350 = vmatmul.mubr.f32.gmra.mxu0 %v729
        %v1351 = vpop.f32.mrf.mxu0
        %v1352 = vadd.f32 0.0, %v1351
        %v1353 = vpop.f32.mrf.mxu0
        %1354 = vmatprep.mubr.f32.mxu0 0.0
        %1355 = vmatmul.mubr.f32.gmra.mxu0 %v730
        %v1356 = vpop.f32.mrf.mxu0
        %v1357 = vadd.f32 0.0, %v1356
        %v1358 = vpop.f32.mrf.mxu0
        %1359 = vmatprep.mubr.f32.mxu0 0.0
        %1360 = vmatmul.mubr.f32.gmra.mxu0 %v731
        %v1361 = vpop.f32.mrf.mxu0
        %v1362 = vadd.f32 0.0, %v1361
        %v1363 = vpop.f32.mrf.mxu0
        %1364 = vmatprep.mubr.f32.mxu0 0.0
        %1365 = vmatmul.mubr.f32.gmra.mxu0 %v732
        %v1366 = vpop.f32.mrf.mxu0
        %v1367 = vadd.f32 0.0, %v1366
        %v1368 = vpop.f32.mrf.mxu0
        %1369 = vmatprep.mubr.f32.mxu0 0.0
        %1370 = vmatmul.mubr.f32.gmra.mxu0 %v733
        %v1371 = vpop.f32.mrf.mxu0
        %v1372 = vadd.f32 0.0, %v1371
        %v1373 = vpop.f32.mrf.mxu0
        %1374 = vmatprep.mubr.f32.mxu0 0.0
        %1375 = vmatmul.mubr.f32.gmra.mxu0 %v734
        %v1376 = vpop.f32.mrf.mxu0
        %v1377 = vadd.f32 0.0, %v1376
        %v1378 = vpop.f32.mrf.mxu0
        %1379 = vmatprep.mubr.f32.mxu0 0.0
        %1380 = vmatmul.mubr.f32.gmra.mxu0 %v735
        %v1381 = vpop.f32.mrf.mxu0
        %v1382 = vadd.f32 0.0, %v1381
        %v1383 = vpop.f32.mrf.mxu0
        %1384 = vmatprep.mubr.f32.mxu0 0.0
        %1385 = vmatmul.mubr.f32.gmra.mxu0 %v736
        %v1386 = vpop.f32.mrf.mxu0
        %v1387 = vadd.f32 0.0, %v1386
        %v1388 = vpop.f32.mrf.mxu0
        %1389 = vmatprep.mubr.f32.mxu0 0.0
        %1390 = vmatmul.mubr.f32.gmra.mxu0 %v737
        %v1391 = vpop.f32.mrf.mxu0
        %v1392 = vadd.f32 0.0, %v1391
        %v1393 = vpop.f32.mrf.mxu0
        %1394 = vmatprep.mubr.f32.mxu0 0.0
        %1395 = vmatmul.mubr.f32.gmra.mxu0 %v738
        %v1396 = vpop.f32.mrf.mxu0
        %v1397 = vadd.f32 0.0, %v1396
        %v1398 = vpop.f32.mrf.mxu0
        %1399 = vmatprep.mubr.f32.mxu0 0.0
        %1400 = vmatmul.mubr.f32.gmra.mxu0 %v739
        %v1401 = vpop.f32.mrf.mxu0
        %v1402 = vadd.f32 0.0, %v1401
        %v1403 = vpop.f32.mrf.mxu0
        %1404 = vmatprep.mubr.f32.mxu0 0.0
        %1405 = vmatmul.mubr.f32.gmra.mxu0 %v740
        %v1406 = vpop.f32.mrf.mxu0
        %v1407 = vadd.f32 0.0, %v1406
        %v1408 = vpop.f32.mrf.mxu0
        %1409 = vmatprep.mubr.f32.mxu0 0.0
        %1410 = vmatmul.mubr.f32.gmra.mxu0 %v741
        %v1411 = vpop.f32.mrf.mxu0
        %v1412 = vadd.f32 0.0, %v1411
        %v1413 = vpop.f32.mrf.mxu0
        %1414 = vmatprep.mubr.f32.mxu0 0.0
        %1415 = vmatmul.mubr.f32.gmra.mxu0 %v742
        %v1416 = vpop.f32.mrf.mxu0
        %v1417 = vadd.f32 0.0, %v1416
        %v1418 = vpop.f32.mrf.mxu0
        %1419 = vmatprep.mubr.f32.mxu0 0.0
        %1420 = vmatmul.mubr.f32.gmra.mxu0 %v743
        %v1421 = vpop.f32.mrf.mxu0
        %v1422 = vadd.f32 0.0, %v1421
        %v1423 = vpop.f32.mrf.mxu0
        %1424 = vmatprep.mubr.f32.mxu0 0.0
        %1425 = vmatmul.mubr.f32.gmra.mxu0 %v744
        %v1426 = vpop.f32.mrf.mxu0
        %v1427 = vadd.f32 0.0, %v1426
        %v1428 = vpop.f32.mrf.mxu0
        %1429 = vmatprep.mubr.f32.mxu0 0.0
        %1430 = vmatmul.mubr.f32.gmra.mxu0 %v745
        %v1431 = vpop.f32.mrf.mxu0
        %v1432 = vadd.f32 0.0, %v1431
        %v1433 = vpop.f32.mrf.mxu0
        %1434 = vmatprep.mubr.f32.mxu0 0.0
        %1435 = vmatmul.mubr.f32.gmra.mxu0 %v746
        %v1436 = vpop.f32.mrf.mxu0
        %v1437 = vadd.f32 0.0, %v1436
        %v1438 = vpop.f32.mrf.mxu0
        %1439 = vmatprep.mubr.f32.mxu0 0.0
        %1440 = vmatmul.mubr.f32.gmra.mxu0 %v747
        %v1441 = vpop.f32.mrf.mxu0
        %v1442 = vadd.f32 0.0, %v1441
        %v1443 = vpop.f32.mrf.mxu0
        %1444 = vmatprep.mubr.f32.mxu0 0.0
        %1445 = vmatmul.mubr.f32.gmra.mxu0 %v748
        %v1446 = vpop.f32.mrf.mxu0
        %v1447 = vadd.f32 0.0, %v1446
        %v1448 = vpop.f32.mrf.mxu0
        %1449 = vmatprep.mubr.f32.mxu0 0.0
        %1450 = vmatmul.mubr.f32.gmra.mxu0 %v749
        %v1451 = vpop.f32.mrf.mxu0
        %v1452 = vadd.f32 0.0, %v1451
        %v1453 = vpop.f32.mrf.mxu0
        %1454 = vmatprep.mubr.f32.mxu0 0.0
        %1455 = vmatmul.mubr.f32.gmra.mxu0 %v750
        %v1456 = vpop.f32.mrf.mxu0
        %v1457 = vadd.f32 0.0, %v1456
        %v1458 = vpop.f32.mrf.mxu0
        %1459 = vmatprep.mubr.f32.mxu0 0.0
        %1460 = vmatmul.mubr.f32.gmra.mxu0 %v751
        %v1461 = vpop.f32.mrf.mxu0
        %v1462 = vadd.f32 0.0, %v1461
        %v1463 = vpop.f32.mrf.mxu0
        %1464 = vmatprep.mubr.f32.mxu0 0.0
        %1465 = vmatmul.mubr.f32.gmra.mxu0 %v752
        %v1466 = vpop.f32.mrf.mxu0
        %v1467 = vadd.f32 0.0, %v1466
        %v1468 = vpop.f32.mrf.mxu0
        %1469 = vmatprep.mubr.f32.mxu0 0.0
        %1470 = vmatmul.mubr.f32.gmra.mxu0 %v753
        %v1471 = vpop.f32.mrf.mxu0
        %v1472 = vadd.f32 0.0, %v1471
        %v1473 = vpop.f32.mrf.mxu0
        %1474 = vmatprep.mubr.f32.mxu0 0.0
        %1475 = vmatmul.mubr.f32.gmra.mxu0 %v754
        %v1476 = vpop.f32.mrf.mxu0
        %v1477 = vadd.f32 0.0, %v1476
        %v1478 = vpop.f32.mrf.mxu0
        %1479 = vdwg.mxu0
        %v1480 = vadd.f32 %v1080, %v1322
        %v1481 = vadd.f32 %v1085, %v1327
        %v1482 = vadd.f32 %v1090, %v1332
        %v1483 = vadd.f32 %v1095, %v1337
        %v1484 = vadd.f32 %v1100, %v1342
        %v1485 = vadd.f32 %v1105, %v1347
        %v1486 = vadd.f32 %v1110, %v1352
        %v1487 = vadd.f32 %v1115, %v1357
        %v1488 = vadd.f32 %v1120, %v1362
        %v1489 = vadd.f32 %v1125, %v1367
        %v1490 = vadd.f32 %v1130, %v1372
        %v1491 = vadd.f32 %v1135, %v1377
        %v1492 = vadd.f32 %v1140, %v1382
        %v1493 = vadd.f32 %v1145, %v1387
        %v1494 = vadd.f32 %v1150, %v1392
        %v1495 = vadd.f32 %v1155, %v1397
        %v1496 = vadd.f32 %v1160, %v1402
        %v1497 = vadd.f32 %v1165, %v1407
        %v1498 = vadd.f32 %v1170, %v1412
        %v1499 = vadd.f32 %v1175, %v1417
        %v1500 = vadd.f32 %v1180, %v1422
        %v1501 = vadd.f32 %v1185, %v1427
        %v1502 = vadd.f32 %v1190, %v1432
        %v1503 = vadd.f32 %v1195, %v1437
        %v1504 = vadd.f32 %v1200, %v1442
        %v1505 = vadd.f32 %v1205, %v1447
        %v1506 = vadd.f32 %v1210, %v1452
        %v1507 = vadd.f32 %v1215, %v1457
        %v1508 = vadd.f32 %v1220, %v1462
        %v1509 = vadd.f32 %v1225, %v1467
        %v1510 = vadd.f32 %v1230, %v1472
        %v1511 = vadd.f32 %v1235, %v1477
        %v1512 = vlaneseq
        %v1513 = vshrl.u32 %v1512, 7
        %v1514 = vsub.s32 5, %v1513
        %v1515 = vrot.slane %v350, %v1514
        %v1516 = vadd.f32 %v1480, %v1515
        %v1517 = vadd.f32 %v1481, %v1515
        %v1518 = vadd.f32 %v1482, %v1515
        %v1519 = vadd.f32 %v1483, %v1515
        %v1520 = vadd.f32 %v1484, %v1515
        %v1521 = vadd.f32 %v1485, %v1515
        %v1522 = vadd.f32 %v1486, %v1515
        %v1523 = vadd.f32 %v1487, %v1515
        %v1524 = vadd.f32 %v1488, %v1515
        %v1525 = vadd.f32 %v1489, %v1515
        %v1526 = vadd.f32 %v1490, %v1515
        %v1527 = vadd.f32 %v1491, %v1515
        %v1528 = vadd.f32 %v1492, %v1515
        %v1529 = vadd.f32 %v1493, %v1515
        %v1530 = vadd.f32 %v1494, %v1515
        %v1531 = vadd.f32 %v1495, %v1515
        %v1532 = vadd.f32 %v1496, %v1515
        %v1533 = vadd.f32 %v1497, %v1515
        %v1534 = vadd.f32 %v1498, %v1515
        %v1535 = vadd.f32 %v1499, %v1515
        %v1536 = vadd.f32 %v1500, %v1515
        %v1537 = vadd.f32 %v1501, %v1515
        %v1538 = vadd.f32 %v1502, %v1515
        %v1539 = vadd.f32 %v1503, %v1515
        %v1540 = vadd.f32 %v1504, %v1515
        %v1541 = vadd.f32 %v1505, %v1515
        %v1542 = vadd.f32 %v1506, %v1515
        %v1543 = vadd.f32 %v1507, %v1515
        %v1544 = vadd.f32 %v1508, %v1515
        %v1545 = vadd.f32 %v1509, %v1515
        %v1546 = vadd.f32 %v1510, %v1515
        %v1547 = vadd.f32 %v1511, %v1515
        %v1548 = vmax.f32 %v1516, 0.0
        %v1549 = vmax.f32 %v1517, 0.0
        %v1550 = vmax.f32 %v1518, 0.0
        %v1551 = vmax.f32 %v1519, 0.0
        %v1552 = vmax.f32 %v1520, 0.0
        %v1553 = vmax.f32 %v1521, 0.0
        %v1554 = vmax.f32 %v1522, 0.0
        %v1555 = vmax.f32 %v1523, 0.0
        %v1556 = vmax.f32 %v1524, 0.0
        %v1557 = vmax.f32 %v1525, 0.0
        %v1558 = vmax.f32 %v1526, 0.0
        %v1559 = vmax.f32 %v1527, 0.0
        %v1560 = vmax.f32 %v1528, 0.0
        %v1561 = vmax.f32 %v1529, 0.0
        %v1562 = vmax.f32 %v1530, 0.0
        %v1563 = vmax.f32 %v1531, 0.0
        %v1564 = vmax.f32 %v1532, 0.0
        %v1565 = vmax.f32 %v1533, 0.0
        %v1566 = vmax.f32 %v1534, 0.0
        %v1567 = vmax.f32 %v1535, 0.0
        %v1568 = vmax.f32 %v1536, 0.0
        %v1569 = vmax.f32 %v1537, 0.0
        %v1570 = vmax.f32 %v1538, 0.0
        %v1571 = vmax.f32 %v1539, 0.0
        %v1572 = vmax.f32 %v1540, 0.0
        %v1573 = vmax.f32 %v1541, 0.0
        %v1574 = vmax.f32 %v1542, 0.0
        %v1575 = vmax.f32 %v1543, 0.0
        %v1576 = vmax.f32 %v1544, 0.0
        %v1577 = vmax.f32 %v1545, 0.0
        %v1578 = vmax.f32 %v1546, 0.0
        %v1579 = vmax.f32 %v1547, 0.0
        %1580 = vst [vmem:[%s282] sm:$0xff] %v1548
        %1581 = vst [vmem:[%s282 + $0x8] sm:$0xff] %v1549
        %1582 = vst [vmem:[%s282 + $0x10] sm:$0xff] %v1550
        %1583 = vst [vmem:[%s282 + $0x18] sm:$0xff] %v1551
        %1584 = vst [vmem:[%s282 + $0x20] sm:$0xff] %v1552
        %1585 = vst [vmem:[%s282 + $0x28] sm:$0xff] %v1553
        %1586 = vst [vmem:[%s282 + $0x30] sm:$0xff] %v1554
        %1587 = vst [vmem:[%s282 + $0x38] sm:$0xff] %v1555
        %1588 = vst [vmem:[%s282 + $0x40] sm:$0xff] %v1556
        %1589 = vst [vmem:[%s282 + $0x48] sm:$0xff] %v1557
        %1590 = vst [vmem:[%s282 + $0x50] sm:$0xff] %v1558
        %1591 = vst [vmem:[%s282 + $0x58] sm:$0xff] %v1559
        %1592 = vst [vmem:[%s282 + $0x60] sm:$0xff] %v1560
        %1593 = vst [vmem:[%s282 + $0x68] sm:$0xff] %v1561
        %1594 = vst [vmem:[%s282 + $0x70] sm:$0xff] %v1562
        %1595 = vst [vmem:[%s282 + $0x78] sm:$0xff] %v1563
        %1596 = vst [vmem:[%s282 + $0x80] sm:$0xff] %v1564
        %1597 = vst [vmem:[%s282 + $0x88] sm:$0xff] %v1565
        %1598 = vst [vmem:[%s282 + $0x90] sm:$0xff] %v1566
        %1599 = vst [vmem:[%s282 + $0x98] sm:$0xff] %v1567
        %1600 = vst [vmem:[%s282 + $0xa0] sm:$0xff] %v1568
        %1601 = vst [vmem:[%s282 + $0xa8] sm:$0xff] %v1569
        %1602 = vst [vmem:[%s282 + $0xb0] sm:$0xff] %v1570
        %1603 = vst [vmem:[%s282 + $0xb8] sm:$0xff] %v1571
        %1604 = vst [vmem:[%s282 + $0xc0] sm:$0xff] %v1572
        %1605 = vst [vmem:[%s282 + $0xc8] sm:$0xff] %v1573
        %1606 = vst [vmem:[%s282 + $0xd0] sm:$0xff] %v1574
        %1607 = vst [vmem:[%s282 + $0xd8] sm:$0xff] %v1575
        %1608 = vst [vmem:[%s282 + $0xe0] sm:$0xff] %v1576
        %1609 = vst [vmem:[%s282 + $0xe8] sm:$0xff] %v1577
        %1610 = vst [vmem:[%s282 + $0xf0] sm:$0xff] %v1578
        %1611 = vst [vmem:[%s282 + $0xf8] sm:$0xff] %v1579
        %s1612 = sand.u32 %s127, 1
        %s1613 = scalar_lea.sflag [#allocation4], %s1612
        %s1614 = sand.u32 %s127, 1
        %s1615 = smul.addr %s1614, 256
        %s1616 = scalar_lea.vmem [#allocation10], %s1615
        // Predicated region
        $region53: #{tpu_custom_call.1} parent=35 // pred_check
          %p1617 = pneg %p137
        $region54: #{tpu_custom_call.1} parent=35 // pred_check_branch
          %1619 = sbr.rel (%p1617) target = $region56
        $region55: #{tpu_custom_call.1} parent=35 // pred_region
          %s1620 = smul.u32 32, %s25
          %s1622 = ssub.s32 4096, 4096
          %1623 = vsyncadd %s1613, %s1622
          %s1624 = smul.addr %s1620, 128
          %s1625 = scalar_lea.hbm %s4, %s1624
          %s1626 = sshll.u32 %s1616, 4
          %s1627 = int_to_ptr.vmem [resolvable:$true] %s1626
          %1632 = dma.vmem_to_hbm [thread:$0]  %s1627, 4096, %s1625, %s1613, 128, 128, 8
        $region56: #{tpu_custom_call.1} parent=35 // pred_fallthru
          _
      $region36: #{tpu_custom_call.1} parent=5 // pred_fallthru
        _
      %p1633 = scmp.le.s32.totalorder 2, %s20
      // Predicated region
      $region57: #{tpu_custom_call.1} parent=5 // pred_check
        %p1634 = pneg %p1633
      $region58: #{tpu_custom_call.1} parent=5 // pred_check_branch
        %1636 = sbr.rel (%p1634) target = $region60
      $region59: #{tpu_custom_call.1} parent=5 // pred_region
        %s1637 = ssub.s32 %s20, 2
        // Predicated region
        $region61: #{tpu_custom_call.1} parent=59 // pred_check
          %p1638 = pneg %p143
        $region62: #{tpu_custom_call.1} parent=59 // pred_check_branch
          %1640 = sbr.rel (%p1638) target = $region64
        $region63: #{tpu_custom_call.1} parent=59 // pred_region
          %s1641 = sand.u32 %s128, 1
          %s1642 = scalar_lea.sflag [#allocation4], %s1641
          %s1643 = sand.u32 %s128, 1
          %s1644 = smul.addr %s1643, 256
          %s1645 = scalar_lea.vmem [#allocation10], %s1644
          %1646 = dma.done %s1642, 4096
        $region64: #{tpu_custom_call.1} parent=59 // pred_fallthru
          _
      $region60: #{tpu_custom_call.1} parent=5 // pred_fallthru
        _
    $region6: #{tpu_custom_call.1} parent=1 // loop_footer
      %s24 = sadd.s32 1, %s20
    $region7: #{tpu_custom_call.1} parent=1 // loop_footer_branch
      %19 = sbr.rel target = $region3
    $region8: #{tpu_custom_call.1} parent=1 // loop_exit
      _
    %1647 = vsyncpa [#allocation3], 1
    %s1648 = scalar_lea.sflag [#allocation3], 1
    %1649 = vsyncpa %s1648, 1
    %1650 = vsyncpa [#allocation6], 1
    %s1651 = scalar_lea.sflag [#allocation6], 1
    %1652 = vsyncpa %s1651, 1
    %1653 = vsyncpa [#allocation9], 1
    %1654 = vsyncpa [#allocation4], 1
    %s1655 = scalar_lea.sflag [#allocation4], 1
    %1656 = vsyncpa %s1655, 1

</llo_original>
